<compile_context>
chip_gen: v5e
topology: v5e:2x2
jax: 0.10.0
libtpu: 0.0.40
codegen_flags: <defaults>
</compile_context>

<pallas_src>
import functools

import jax
import jax.numpy as jnp
from jax import lax
from jax.experimental import pallas as pl
from jax.experimental.pallas import tpu as pltpu

K = 7
PAD = (K - 1) // 2


def _round_up(x, m):
    return (x + m - 1) // m * m


def _spatial_gate_kernel(w_ref, b_ref, x_ref, o_ref, max_ref, sum_ref, pad_ref,
                         *, C, tc, n_c, chunk, H, W, row_blk):
    # w_ref:   SMEM f32[2*K*K]     BN- and 1/C-folded conv weights, [ci, ky, kx]
    # b_ref:   SMEM f32[1]         BN-folded bias
    # x_ref:   VMEM [1, tc, H*W]   one channel tile of one image (lane-dense)
    # o_ref:   VMEM f32[1, 1, H*Wp] width-padded flat gate (resident over c)
    # max_ref: VMEM f32[1, H*W]    running channel max (flat)
    # sum_ref: VMEM f32[1, H*W]    running channel sum (flat)
    # pad_ref: VMEM f32[2, Lp]     zero-padded pooled planes, flat, row stride Wp
    c_idx = pl.program_id(1)
    Wp = W + 2 * PAD

    @pl.when(c_idx == 0)
    def _init():
        max_ref[...] = jnp.full_like(max_ref, -jnp.inf)
        sum_ref[...] = jnp.zeros_like(sum_ref)

    # ---- single-pass chunked channel reduction ------------------------------
    # One read of the (bf16/f32) tile; max and sum updated from the same load,
    # f32 temporary bounded to (chunk, H*W) regardless of the tile size.
    def _step(s, m):
        xf = x_ref[0, pl.ds(s, m), :].astype(jnp.float32)        # (m, H*W)
        max_ref[0, :] = jnp.maximum(max_ref[0, :], jnp.max(xf, axis=0))
        sum_ref[0, :] = sum_ref[0, :] + jnp.sum(xf, axis=0)

    def _reduce_rows(n_rows):
        n_full, tail = divmod(n_rows, chunk)
        if 0 < n_full <= 8:
            for i in range(n_full):                              # static unroll
                _step(i * chunk, chunk)
        elif n_full > 8:
            @pl.loop(0, n_full)
            def _(i):
                _step(pl.multiple_of(i * chunk, chunk), chunk)
        if tail:
            _step(n_full * chunk, tail)

    rem_last = C - (n_c - 1) * tc   # static: real rows in the last channel tile
    if rem_last == tc:
        _reduce_rows(tc)
    else:
        @pl.when(c_idx < n_c - 1)
        def _full_tiles():
            _reduce_rows(tc)

        @pl.when(c_idx == n_c - 1)
        def _tail_tile():
            # Only the first `rem_last` rows of the last (clamped) tile hold
            # real data; the rest of the buffer is never read, so no masking.
            _reduce_rows(rem_last)

    # ---- once-per-image finalize: 7x7 conv + folded BN + sigmoid ------------
    @pl.when(c_idx == n_c - 1)
    def _finalize():
        # Scatter pooled rows into flat zero-padded planes (row stride Wp) so
        # every conv tap below is a plain 1-D shifted vector load (no 2-D
        # narrow-W vregs anywhere).  1/C is folded into the mean-branch
        # weights, so the raw channel sum is used directly.
        pad_ref[...] = jnp.zeros_like(pad_ref)
        for h in range(H):
            dst = (PAD + h) * Wp + PAD
            pad_ref[0, pl.ds(dst, W)] = max_ref[0, pl.ds(h * W, W)]
            pad_ref[1, pl.ds(dst, W)] = sum_ref[0, pl.ds(h * W, W)]

        # 2 x 7 x 7 conv as 98 scalar-times-vector FMAs on the VPU, row-blocked
        # so the accumulator stays within ~8 vregs even at 224x224.
        bias = b_ref[0]
        for r0 in range(0, H, row_blk):
            rb = min(row_blk, H - r0)
            L = rb * Wp
            acc = jnp.full((L,), bias, jnp.float32)              # bias hoisted once
            for ci in range(2):
                for ky in range(K):
                    base = (r0 + ky) * Wp
                    for kx in range(K):
                        tap = pad_ref[ci, pl.ds(base + kx, L)]
                        acc = acc + w_ref[ci * K * K + ky * K + kx] * tap
            o_ref[0, 0, pl.ds(r0 * Wp, L)] = jax.nn.sigmoid(acc)


def _vmem_budgets():
    """(vmem_limit_bytes, per-input-buffer budget), derived per TPU generation."""
    cap = None
    try:
        cap = getattr(pltpu.get_tpu_info(), "vmem_capacity_bytes", None)
    except Exception:
        cap = None
    if cap is None:
        cap = 64 * 1024 * 1024                      # conservative (v7x-sized VMEM)
    if cap >= 128 * 1024 * 1024:                    # v5e / v6e: 128 MiB physical
        return 64 * 1024 * 1024, 20 * 1024 * 1024
    return 32 * 1024 * 1024, 10 * 1024 * 1024       # v7x: 64 MiB per TensorCore


def _pick_channel_tile(C, HW, itemsize, sub, budget_bytes):
    """Largest channel tile whose *padded* (sublane x 128-lane) VMEM footprint
    fits the per-buffer budget (the pipeline double-buffers it)."""
    row_bytes = _round_up(HW, 128) * itemsize
    if _round_up(C, sub) * row_bytes <= budget_bytes:
        return C                                    # whole channel dim in one tile
    max_rows = max(sub, (budget_bytes // row_bytes) // sub * sub)
    n_steps = -(-C // max_rows)
    return _round_up(-(-C // n_steps), sub)         # balanced tile, multiple of sub


def spatial_gate(x, conv_w, bn_gamma, bn_beta, bn_mean, bn_var, eps=1e-5):
    """x: (N, C, H, W) f32 or bf16.  conv_w: (1, 2, 7, 7).  BN params: shape (1,)."""
    N, C, H, W = x.shape
    HW = H * W
    Wp = W + 2 * PAD

    # Fold eval-mode BatchNorm2d(1) into the bias-free conv, and fold the 1/C of
    # the channel mean into the mean-branch weights (kernel only needs a sum).
    scale = (bn_gamma.astype(jnp.float32) /
             jnp.sqrt(bn_var.astype(jnp.float32) + eps))                  # (1,)
    w = conv_w[0].astype(jnp.float32) * scale[0]                           # (2, K, K)
    w = w.at[1].multiply(1.0 / C)                                          # mean branch
    w_folded = w.reshape(-1)                                               # (2*K*K,)
    b_folded = (bn_beta.astype(jnp.float32) -
                bn_mean.astype(jnp.float32) * scale)                       # (1,)

    itemsize = jnp.dtype(x.dtype).itemsize
    sub = 32 // itemsize                       # sublane packing: 8 f32 / 16 bf16
    vmem_limit, buf_budget = _vmem_budgets()
    tc = _pick_channel_tile(C, HW, itemsize, sub, buf_budget)
    n_c = -(-C // tc)

    lane_hw = _round_up(HW, 128)
    # Channel sub-chunk per reduction step: big enough to amortize the scratch
    # read-modify-write, small enough to bound the f32 temporary (~256 KiB).
    chunk = min(4 * sub, max(sub, ((256 * 1024) // (lane_hw * 4)) // sub * sub))
    # Row block for the finalize conv: keeps the accumulator within ~8 vregs.
    row_blk = max(1, min(H, 8192 // Wp))
    # Flat zero-padded pooled plane length (+2*PAD slack for the last taps).
    lp = _round_up((H + 2 * PAD) * Wp + 2 * PAD, 128)

    x_flat = x.reshape(N, C, HW)               # lane-dense view; no data movement

    kernel = functools.partial(
        _spatial_gate_kernel,
        C=C, tc=tc, n_c=n_c, chunk=chunk, H=H, W=W, row_blk=row_blk)

    # TODO(synk): on v7x with N < 2 (single-image inference) the batch-parallel
    # axis leaves the second TensorCore idle; split the channel reduction across
    # cores (core_map + per-core partial max/sum combined on one core) instead.
    # With remaining VMEM headroom, pipeline_mode=pl.Buffered(3) on the x spec
    # could shave a few more % of exposed DMA latency; left at default depth.
    out_flat = pl.pallas_call(
        kernel,
        out_shape=jax.ShapeDtypeStruct((N, 1, H * Wp), jnp.float32),
        grid=(N, n_c),
        in_specs=[
            pl.BlockSpec(memory_space=pltpu.MemorySpace.SMEM),             # folded weights
            pl.BlockSpec(memory_space=pltpu.MemorySpace.SMEM),             # folded bias
            pl.BlockSpec((1, tc, HW), lambda n, c: (n, c, 0)),             # channel tile
        ],
        out_specs=pl.BlockSpec((1, 1, H * Wp), lambda n, c: (n, 0, 0)),    # resident over c
        scratch_shapes=[
            pltpu.VMEM((1, HW), jnp.float32),      # running channel max (flat)
            pltpu.VMEM((1, HW), jnp.float32),      # running channel sum (flat)
            pltpu.VMEM((2, lp), jnp.float32),      # zero-padded pooled planes (flat)
        ],
        compiler_params=pltpu.CompilerParams(
            dimension_semantics=("parallel", "arbitrary"),
            vmem_limit_bytes=vmem_limit,
        ),
    )(w_folded, b_folded, x_flat)

    # Trim the 2*PAD junk columns of the width-padded flat conv domain.
    return out_flat.reshape(N, 1, H, Wp)[:, :, :, :W]


def spatial_gate_reference(x, conv_w, bn_gamma, bn_beta, bn_mean, bn_var, eps=1e-5):
    xf = x.astype(jnp.float32)
    pooled = jnp.concatenate(
        [jnp.max(xf, axis=1, keepdims=True), jnp.mean(xf, axis=1, keepdims=True)],
        axis=1)
    y = lax.conv_general_dilated(
        pooled, conv_w.astype(jnp.float32), window_strides=(1, 1),
        padding=[(PAD, PAD), (PAD, PAD)],
        dimension_numbers=("NCHW", "OIHW", "NCHW"))
    g = bn_gamma.reshape(1, -1, 1, 1)
    b = bn_beta.reshape(1, -1, 1, 1)
    m = bn_mean.reshape(1, -1, 1, 1)
    v = bn_var.reshape(1, -1, 1, 1)
    y = g * (y - m) / jnp.sqrt(v + eps) + b
    return jax.nn.sigmoid(y)


if __name__ == "__main__":
    key = jax.random.PRNGKey(0)
    kx_key, kw_key = jax.random.split(key)

    N, C, H, W = 2, 4, 16, 16
    x = jax.random.normal(kx_key, (N, C, H, W), dtype=jnp.float32)

    # Deterministic synthetic parameters (no checkpoint load).
    conv_w = 0.1 * jax.random.normal(kw_key, (1, 2, K, K), dtype=jnp.float32)
    # BatchNorm2d(1) eval-mode parameters / running stats (non-trivial values
    # so the BN fold is actually exercised).
    bn_gamma = jnp.full((1,), 1.5, jnp.float32)
    bn_beta = jnp.full((1,), 0.1, jnp.float32)
    bn_mean = jnp.full((1,), 0.05, jnp.float32)
    bn_var = jnp.full((1,), 0.9, jnp.float32)

    out = spatial_gate(x, conv_w, bn_gamma, bn_beta, bn_mean, bn_var)
    out = jax.block_until_ready(out)

    ref = spatial_gate_reference(x, conv_w, bn_gamma, bn_beta, bn_mean, bn_var)
    ref = jax.block_until_ready(ref)

    assert out.shape == (N, 1, H, W), out.shape
    max_err = float(jnp.max(jnp.abs(out - ref)))
    assert jnp.allclose(out, ref, atol=2e-5, rtol=1e-5), max_err

    print("KERNEL_OK")
</pallas_src>

<mosaic_0001>
module attributes {stable_mosaic.version = 11 : i64} {
  func.func @_spatial_gate_kernel(%arg0: i32, %arg1: i32, %arg2: memref<98xf32, #tpu.memory_space<smem>>, %arg3: memref<1xf32, #tpu.memory_space<smem>>, %arg4: memref<1x4x256xf32, #tpu.memory_space<vmem>>, %arg5: memref<1x1x352xf32, #tpu.memory_space<vmem>>, %arg6: memref<1x256xf32, #tpu.memory_space<vmem>>, %arg7: memref<1x256xf32, #tpu.memory_space<vmem>>, %arg8: memref<2x512xf32, #tpu.memory_space<vmem>>) attributes {dimension_semantics = [#tpu.dimension_semantics<parallel>, #tpu.dimension_semantics<arbitrary>], iteration_bounds = array<i64: 2, 1>, scalar_prefetch = 0 : i64, scratch_operands = 3 : i64, tpu.core_type = #tpu.core_type<tc>, window_params = [{transform_indices = @transform_0, window_bounds = array<i64: 98>}, {transform_indices = @transform_1, window_bounds = array<i64: 1>}, {transform_indices = @transform_2, window_bounds = array<i64: 1, 4, 256>}, {transform_indices = @transform_3, window_bounds = array<i64: 1, 1, 352>}]} {
    %c0_i32 = arith.constant 0 : i32
    %0 = arith.cmpi eq, %arg1, %c0_i32 : i32
    %1 = arith.extui %0 : i1 to i32
    %c0_i32_0 = arith.constant 0 : i32
    %2 = arith.cmpi ne, %1, %c0_i32_0 : i32
    scf.if %2 {
      %cst_14 = arith.constant 0xFF800000 : f32
      %22 = vector.broadcast %cst_14 : f32 to vector<1x256xf32>
      %c0_15 = arith.constant 0 : index
      %c0_16 = arith.constant 0 : index
      %23 = vector.load %arg6[%c0_15, %c0_16] : memref<1x256xf32, #tpu.memory_space<vmem>>, vector<1x256xf32>
      tpu.vector_store %arg6[%c0_15, %c0_16], %22 {strides = array<i32>} : memref<1x256xf32, #tpu.memory_space<vmem>>, vector<1x256xf32>,
      %cst_17 = arith.constant 0.000000e+00 : f32
      %24 = vector.broadcast %cst_17 : f32 to vector<1x256xf32>
      %c0_18 = arith.constant 0 : index
      %c0_19 = arith.constant 0 : index
      %25 = vector.load %arg7[%c0_18, %c0_19] : memref<1x256xf32, #tpu.memory_space<vmem>>, vector<1x256xf32>
      tpu.vector_store %arg7[%c0_18, %c0_19], %24 {strides = array<i32>} : memref<1x256xf32, #tpu.memory_space<vmem>>, vector<1x256xf32>,
    } else {
    }
    %c0 = arith.constant 0 : index
    %c0_1 = arith.constant 0 : index
    %c0_2 = arith.constant 0 : index
    %3 = vector.load %arg4[%c0, %c0_1, %c0_2] : memref<1x4x256xf32, #tpu.memory_space<vmem>>, vector<1x4x256xf32>
    %4 = vector.shape_cast %3 : vector<1x4x256xf32> to vector<4x256xf32>
    %c0_3 = arith.constant 0 : index
    %c0_4 = arith.constant 0 : index
    %5 = vector.load %arg6[%c0_3, %c0_4] : memref<1x256xf32, #tpu.memory_space<vmem>>, vector<1x256xf32>
    %6 = vector.shape_cast %5 : vector<1x256xf32> to vector<256xf32>
    %cst = arith.constant dense<0xFF800000> : vector<256xf32>
    %7 = vector.multi_reduction <maximumf>, %4, %cst [0] : vector<4x256xf32> to vector<256xf32>
    %8 = arith.maximumf %6, %7 : vector<256xf32>
    %c0_5 = arith.constant 0 : index
    %c0_6 = arith.constant 0 : index
    %9 = vector.load %arg6[%c0_5, %c0_6] : memref<1x256xf32, #tpu.memory_space<vmem>>, vector<1x256xf32>
    %10 = vector.shape_cast %9 : vector<1x256xf32> to vector<256xf32>
    %11 = vector.shape_cast %8 : vector<256xf32> to vector<1x256xf32>
    tpu.vector_store %arg6[%c0_5, %c0_6], %11 {strides = array<i32>} : memref<1x256xf32, #tpu.memory_space<vmem>>, vector<1x256xf32>,
    %c0_7 = arith.constant 0 : index
    %c0_8 = arith.constant 0 : index
    %12 = vector.load %arg7[%c0_7, %c0_8] : memref<1x256xf32, #tpu.memory_space<vmem>>, vector<1x256xf32>
    %13 = vector.shape_cast %12 : vector<1x256xf32> to vector<256xf32>
    %cst_9 = arith.constant dense<0.000000e+00> : vector<256xf32>
    %14 = vector.multi_reduction <add>, %4, %cst_9 [0] : vector<4x256xf32> to vector<256xf32>
    %15 = arith.addf %13, %14 : vector<256xf32>
    %c0_10 = arith.constant 0 : index
    %c0_11 = arith.constant 0 : index
    %16 = vector.load %arg7[%c0_10, %c0_11] : memref<1x256xf32, #tpu.memory_space<vmem>>, vector<1x256xf32>
    %17 = vector.shape_cast %16 : vector<1x256xf32> to vector<256xf32>
    %18 = vector.shape_cast %15 : vector<256xf32> to vector<1x256xf32>
    tpu.vector_store %arg7[%c0_10, %c0_11], %18 {strides = array<i32>} : memref<1x256xf32, #tpu.memory_space<vmem>>, vector<1x256xf32>,
    %c0_i32_12 = arith.constant 0 : i32
    %19 = arith.cmpi eq, %arg1, %c0_i32_12 : i32
    %20 = arith.extui %19 : i1 to i32
    %c0_i32_13 = arith.constant 0 : i32
    %21 = arith.cmpi ne, %20, %c0_i32_13 : i32
    scf.if %21 {
      %cst_14 = arith.constant 0.000000e+00 : f32
      %22 = vector.broadcast %cst_14 : f32 to vector<2x512xf32>
      %c0_15 = arith.constant 0 : index
      %c0_16 = arith.constant 0 : index
      %23 = vector.load %arg8[%c0_15, %c0_16] : memref<2x512xf32, #tpu.memory_space<vmem>>, vector<2x512xf32>
      tpu.vector_store %arg8[%c0_15, %c0_16], %22 {strides = array<i32>} : memref<2x512xf32, #tpu.memory_space<vmem>>, vector<2x512xf32>,
      %c0_17 = arith.constant 0 : index
      %c0_18 = arith.constant 0 : index
      %24 = vector.load %arg6[%c0_17, %c0_18] : memref<1x256xf32, #tpu.memory_space<vmem>>, vector<1x16xf32>
      %25 = vector.shape_cast %24 : vector<1x16xf32> to vector<16xf32>
      %c0_19 = arith.constant 0 : index
      %c69 = arith.constant 69 : index
      %26 = vector.load %arg8[%c0_19, %c69] : memref<2x512xf32, #tpu.memory_space<vmem>>, vector<1x16xf32>
      %27 = vector.shape_cast %26 : vector<1x16xf32> to vector<16xf32>
      %28 = vector.shape_cast %25 : vector<16xf32> to vector<1x16xf32>
      tpu.vector_store %arg8[%c0_19, %c69], %28 {strides = array<i32>} : memref<2x512xf32, #tpu.memory_space<vmem>>, vector<1x16xf32>,
      %c0_20 = arith.constant 0 : index
      %c0_21 = arith.constant 0 : index
      %29 = vector.load %arg7[%c0_20, %c0_21] : memref<1x256xf32, #tpu.memory_space<vmem>>, vector<1x16xf32>
      %30 = vector.shape_cast %29 : vector<1x16xf32> to vector<16xf32>
      %c1 = arith.constant 1 : index
      %c69_22 = arith.constant 69 : index
      %31 = vector.load %arg8[%c1, %c69_22] : memref<2x512xf32, #tpu.memory_space<vmem>>, vector<1x16xf32>
      %32 = vector.shape_cast %31 : vector<1x16xf32> to vector<16xf32>
      %33 = vector.shape_cast %30 : vector<16xf32> to vector<1x16xf32>
      tpu.vector_store %arg8[%c1, %c69_22], %33 {strides = array<i32>} : memref<2x512xf32, #tpu.memory_space<vmem>>, vector<1x16xf32>,
      %c0_23 = arith.constant 0 : index
      %c16 = arith.constant 16 : index
      %34 = vector.load %arg6[%c0_23, %c16] : memref<1x256xf32, #tpu.memory_space<vmem>>, vector<1x16xf32>
      %35 = vector.shape_cast %34 : vector<1x16xf32> to vector<16xf32>
      %c0_24 = arith.constant 0 : index
      %c91 = arith.constant 91 : index
      %36 = vector.load %arg8[%c0_24, %c91] : memref<2x512xf32, #tpu.memory_space<vmem>>, vector<1x16xf32>
      %37 = vector.shape_cast %36 : vector<1x16xf32> to vector<16xf32>
      %38 = vector.shape_cast %35 : vector<16xf32> to vector<1x16xf32>
      tpu.vector_store %arg8[%c0_24, %c91], %38 {strides = array<i32>} : memref<2x512xf32, #tpu.memory_space<vmem>>, vector<1x16xf32>,
      %c0_25 = arith.constant 0 : index
      %c16_26 = arith.constant 16 : index
      %39 = vector.load %arg7[%c0_25, %c16_26] : memref<1x256xf32, #tpu.memory_space<vmem>>, vector<1x16xf32>
      %40 = vector.shape_cast %39 : vector<1x16xf32> to vector<16xf32>
      %c1_27 = arith.constant 1 : index
      %c91_28 = arith.constant 91 : index
      %41 = vector.load %arg8[%c1_27, %c91_28] : memref<2x512xf32, #tpu.memory_space<vmem>>, vector<1x16xf32>
      %42 = vector.shape_cast %41 : vector<1x16xf32> to vector<16xf32>
      %43 = vector.shape_cast %40 : vector<16xf32> to vector<1x16xf32>
      tpu.vector_store %arg8[%c1_27, %c91_28], %43 {strides = array<i32>} : memref<2x512xf32, #tpu.memory_space<vmem>>, vector<1x16xf32>,
      %c0_29 = arith.constant 0 : index
      %c32 = arith.constant 32 : index
      %44 = vector.load %arg6[%c0_29, %c32] : memref<1x256xf32, #tpu.memory_space<vmem>>, vector<1x16xf32>
      %45 = vector.shape_cast %44 : vector<1x16xf32> to vector<16xf32>
      %c0_30 = arith.constant 0 : index
      %c113 = arith.constant 113 : index
      %46 = vector.load %arg8[%c0_30, %c113] : memref<2x512xf32, #tpu.memory_space<vmem>>, vector<1x16xf32>
      %47 = vector.shape_cast %46 : vector<1x16xf32> to vector<16xf32>
      %48 = vector.shape_cast %45 : vector<16xf32> to vector<1x16xf32>
      tpu.vector_store %arg8[%c0_30, %c113], %48 {strides = array<i32>} : memref<2x512xf32, #tpu.memory_space<vmem>>, vector<1x16xf32>,
      %c0_31 = arith.constant 0 : index
      %c32_32 = arith.constant 32 : index
      %49 = vector.load %arg7[%c0_31, %c32_32] : memref<1x256xf32, #tpu.memory_space<vmem>>, vector<1x16xf32>
      %50 = vector.shape_cast %49 : vector<1x16xf32> to vector<16xf32>
      %c1_33 = arith.constant 1 : index
      %c113_34 = arith.constant 113 : index
      %51 = vector.load %arg8[%c1_33, %c113_34] : memref<2x512xf32, #tpu.memory_space<vmem>>, vector<1x16xf32>
      %52 = vector.shape_cast %51 : vector<1x16xf32> to vector<16xf32>
      %53 = vector.shape_cast %50 : vector<16xf32> to vector<1x16xf32>
      tpu.vector_store %arg8[%c1_33, %c113_34], %53 {strides = array<i32>} : memref<2x512xf32, #tpu.memory_space<vmem>>, vector<1x16xf32>,
      %c0_35 = arith.constant 0 : index
      %c48 = arith.constant 48 : index
      %54 = vector.load %arg6[%c0_35, %c48] : memref<1x256xf32, #tpu.memory_space<vmem>>, vector<1x16xf32>
      %55 = vector.shape_cast %54 : vector<1x16xf32> to vector<16xf32>
      %c0_36 = arith.constant 0 : index
      %c135 = arith.constant 135 : index
      %56 = vector.load %arg8[%c0_36, %c135] : memref<2x512xf32, #tpu.memory_space<vmem>>, vector<1x16xf32>
      %57 = vector.shape_cast %56 : vector<1x16xf32> to vector<16xf32>
      %58 = vector.shape_cast %55 : vector<16xf32> to vector<1x16xf32>
      tpu.vector_store %arg8[%c0_36, %c135], %58 {strides = array<i32>} : memref<2x512xf32, #tpu.memory_space<vmem>>, vector<1x16xf32>,
      %c0_37 = arith.constant 0 : index
      %c48_38 = arith.constant 48 : index
      %59 = vector.load %arg7[%c0_37, %c48_38] : memref<1x256xf32, #tpu.memory_space<vmem>>, vector<1x16xf32>
      %60 = vector.shape_cast %59 : vector<1x16xf32> to vector<16xf32>
      %c1_39 = arith.constant 1 : index
      %c135_40 = arith.constant 135 : index
      %61 = vector.load %arg8[%c1_39, %c135_40] : memref<2x512xf32, #tpu.memory_space<vmem>>, vector<1x16xf32>
      %62 = vector.shape_cast %61 : vector<1x16xf32> to vector<16xf32>
      %63 = vector.shape_cast %60 : vector<16xf32> to vector<1x16xf32>
      tpu.vector_store %arg8[%c1_39, %c135_40], %63 {strides = array<i32>} : memref<2x512xf32, #tpu.memory_space<vmem>>, vector<1x16xf32>,
      %c0_41 = arith.constant 0 : index
      %c64 = arith.constant 64 : index
      %64 = vector.load %arg6[%c0_41, %c64] : memref<1x256xf32, #tpu.memory_space<vmem>>, vector<1x16xf32>
      %65 = vector.shape_cast %64 : vector<1x16xf32> to vector<16xf32>
      %c0_42 = arith.constant 0 : index
      %c157 = arith.constant 157 : index
      %66 = vector.load %arg8[%c0_42, %c157] : memref<2x512xf32, #tpu.memory_space<vmem>>, vector<1x16xf32>
      %67 = vector.shape_cast %66 : vector<1x16xf32> to vector<16xf32>
      %68 = vector.shape_cast %65 : vector<16xf32> to vector<1x16xf32>
      tpu.vector_store %arg8[%c0_42, %c157], %68 {strides = array<i32>} : memref<2x512xf32, #tpu.memory_space<vmem>>, vector<1x16xf32>,
      %c0_43 = arith.constant 0 : index
      %c64_44 = arith.constant 64 : index
      %69 = vector.load %arg7[%c0_43, %c64_44] : memref<1x256xf32, #tpu.memory_space<vmem>>, vector<1x16xf32>
      %70 = vector.shape_cast %69 : vector<1x16xf32> to vector<16xf32>
      %c1_45 = arith.constant 1 : index
      %c157_46 = arith.constant 157 : index
      %71 = vector.load %arg8[%c1_45, %c157_46] : memref<2x512xf32, #tpu.memory_space<vmem>>, vector<1x16xf32>
      %72 = vector.shape_cast %71 : vector<1x16xf32> to vector<16xf32>
      %73 = vector.shape_cast %70 : vector<16xf32> to vector<1x16xf32>
      tpu.vector_store %arg8[%c1_45, %c157_46], %73 {strides = array<i32>} : memref<2x512xf32, #tpu.memory_space<vmem>>, vector<1x16xf32>,
      %c0_47 = arith.constant 0 : index
      %c80 = arith.constant 80 : index
      %74 = vector.load %arg6[%c0_47, %c80] : memref<1x256xf32, #tpu.memory_space<vmem>>, vector<1x16xf32>
      %75 = vector.shape_cast %74 : vector<1x16xf32> to vector<16xf32>
      %c0_48 = arith.constant 0 : index
      %c179 = arith.constant 179 : index
      %76 = vector.load %arg8[%c0_48, %c179] : memref<2x512xf32, #tpu.memory_space<vmem>>, vector<1x16xf32>
      %77 = vector.shape_cast %76 : vector<1x16xf32> to vector<16xf32>
      %78 = vector.shape_cast %75 : vector<16xf32> to vector<1x16xf32>
      tpu.vector_store %arg8[%c0_48, %c179], %78 {strides = array<i32>} : memref<2x512xf32, #tpu.memory_space<vmem>>, vector<1x16xf32>,
      %c0_49 = arith.constant 0 : index
      %c80_50 = arith.constant 80 : index
      %79 = vector.load %arg7[%c0_49, %c80_50] : memref<1x256xf32, #tpu.memory_space<vmem>>, vector<1x16xf32>
      %80 = vector.shape_cast %79 : vector<1x16xf32> to vector<16xf32>
      %c1_51 = arith.constant 1 : index
      %c179_52 = arith.constant 179 : index
      %81 = vector.load %arg8[%c1_51, %c179_52] : memref<2x512xf32, #tpu.memory_space<vmem>>, vector<1x16xf32>
      %82 = vector.shape_cast %81 : vector<1x16xf32> to vector<16xf32>
      %83 = vector.shape_cast %80 : vector<16xf32> to vector<1x16xf32>
      tpu.vector_store %arg8[%c1_51, %c179_52], %83 {strides = array<i32>} : memref<2x512xf32, #tpu.memory_space<vmem>>, vector<1x16xf32>,
      %c0_53 = arith.constant 0 : index
      %c96 = arith.constant 96 : index
      %84 = vector.load %arg6[%c0_53, %c96] : memref<1x256xf32, #tpu.memory_space<vmem>>, vector<1x16xf32>
      %85 = vector.shape_cast %84 : vector<1x16xf32> to vector<16xf32>
      %c0_54 = arith.constant 0 : index
      %c201 = arith.constant 201 : index
      %86 = vector.load %arg8[%c0_54, %c201] : memref<2x512xf32, #tpu.memory_space<vmem>>, vector<1x16xf32>
      %87 = vector.shape_cast %86 : vector<1x16xf32> to vector<16xf32>
      %88 = vector.shape_cast %85 : vector<16xf32> to vector<1x16xf32>
      tpu.vector_store %arg8[%c0_54, %c201], %88 {strides = array<i32>} : memref<2x512xf32, #tpu.memory_space<vmem>>, vector<1x16xf32>,
      %c0_55 = arith.constant 0 : index
      %c96_56 = arith.constant 96 : index
      %89 = vector.load %arg7[%c0_55, %c96_56] : memref<1x256xf32, #tpu.memory_space<vmem>>, vector<1x16xf32>
      %90 = vector.shape_cast %89 : vector<1x16xf32> to vector<16xf32>
      %c1_57 = arith.constant 1 : index
      %c201_58 = arith.constant 201 : index
      %91 = vector.load %arg8[%c1_57, %c201_58] : memref<2x512xf32, #tpu.memory_space<vmem>>, vector<1x16xf32>
      %92 = vector.shape_cast %91 : vector<1x16xf32> to vector<16xf32>
      %93 = vector.shape_cast %90 : vector<16xf32> to vector<1x16xf32>
      tpu.vector_store %arg8[%c1_57, %c201_58], %93 {strides = array<i32>} : memref<2x512xf32, #tpu.memory_space<vmem>>, vector<1x16xf32>,
      %c0_59 = arith.constant 0 : index
      %c112 = arith.constant 112 : index
      %94 = vector.load %arg6[%c0_59, %c112] : memref<1x256xf32, #tpu.memory_space<vmem>>, vector<1x16xf32>
      %95 = vector.shape_cast %94 : vector<1x16xf32> to vector<16xf32>
      %c0_60 = arith.constant 0 : index
      %c223 = arith.constant 223 : index
      %96 = vector.load %arg8[%c0_60, %c223] : memref<2x512xf32, #tpu.memory_space<vmem>>, vector<1x16xf32>
      %97 = vector.shape_cast %96 : vector<1x16xf32> to vector<16xf32>
      %98 = vector.shape_cast %95 : vector<16xf32> to vector<1x16xf32>
      tpu.vector_store %arg8[%c0_60, %c223], %98 {strides = array<i32>} : memref<2x512xf32, #tpu.memory_space<vmem>>, vector<1x16xf32>,
      %c0_61 = arith.constant 0 : index
      %c112_62 = arith.constant 112 : index
      %99 = vector.load %arg7[%c0_61, %c112_62] : memref<1x256xf32, #tpu.memory_space<vmem>>, vector<1x16xf32>
      %100 = vector.shape_cast %99 : vector<1x16xf32> to vector<16xf32>
      %c1_63 = arith.constant 1 : index
      %c223_64 = arith.constant 223 : index
      %101 = vector.load %arg8[%c1_63, %c223_64] : memref<2x512xf32, #tpu.memory_space<vmem>>, vector<1x16xf32>
      %102 = vector.shape_cast %101 : vector<1x16xf32> to vector<16xf32>
      %103 = vector.shape_cast %100 : vector<16xf32> to vector<1x16xf32>
      tpu.vector_store %arg8[%c1_63, %c223_64], %103 {strides = array<i32>} : memref<2x512xf32, #tpu.memory_space<vmem>>, vector<1x16xf32>,
      %c0_65 = arith.constant 0 : index
      %c128 = arith.constant 128 : index
      %104 = vector.load %arg6[%c0_65, %c128] : memref<1x256xf32, #tpu.memory_space<vmem>>, vector<1x16xf32>
      %105 = vector.shape_cast %104 : vector<1x16xf32> to vector<16xf32>
      %c0_66 = arith.constant 0 : index
      %c245 = arith.constant 245 : index
      %106 = vector.load %arg8[%c0_66, %c245] : memref<2x512xf32, #tpu.memory_space<vmem>>, vector<1x16xf32>
      %107 = vector.shape_cast %106 : vector<1x16xf32> to vector<16xf32>
      %108 = vector.shape_cast %105 : vector<16xf32> to vector<1x16xf32>
      tpu.vector_store %arg8[%c0_66, %c245], %108 {strides = array<i32>} : memref<2x512xf32, #tpu.memory_space<vmem>>, vector<1x16xf32>,
      %c0_67 = arith.constant 0 : index
      %c128_68 = arith.constant 128 : index
      %109 = vector.load %arg7[%c0_67, %c128_68] : memref<1x256xf32, #tpu.memory_space<vmem>>, vector<1x16xf32>
      %110 = vector.shape_cast %109 : vector<1x16xf32> to vector<16xf32>
      %c1_69 = arith.constant 1 : index
      %c245_70 = arith.constant 245 : index
      %111 = vector.load %arg8[%c1_69, %c245_70] : memref<2x512xf32, #tpu.memory_space<vmem>>, vector<1x16xf32>
      %112 = vector.shape_cast %111 : vector<1x16xf32> to vector<16xf32>
      %113 = vector.shape_cast %110 : vector<16xf32> to vector<1x16xf32>
      tpu.vector_store %arg8[%c1_69, %c245_70], %113 {strides = array<i32>} : memref<2x512xf32, #tpu.memory_space<vmem>>, vector<1x16xf32>,
      %c0_71 = arith.constant 0 : index
      %c144 = arith.constant 144 : index
      %114 = vector.load %arg6[%c0_71, %c144] : memref<1x256xf32, #tpu.memory_space<vmem>>, vector<1x16xf32>
      %115 = vector.shape_cast %114 : vector<1x16xf32> to vector<16xf32>
      %c0_72 = arith.constant 0 : index
      %c267 = arith.constant 267 : index
      %116 = vector.load %arg8[%c0_72, %c267] : memref<2x512xf32, #tpu.memory_space<vmem>>, vector<1x16xf32>
      %117 = vector.shape_cast %116 : vector<1x16xf32> to vector<16xf32>
      %118 = vector.shape_cast %115 : vector<16xf32> to vector<1x16xf32>
      tpu.vector_store %arg8[%c0_72, %c267], %118 {strides = array<i32>} : memref<2x512xf32, #tpu.memory_space<vmem>>, vector<1x16xf32>,
      %c0_73 = arith.constant 0 : index
      %c144_74 = arith.constant 144 : index
      %119 = vector.load %arg7[%c0_73, %c144_74] : memref<1x256xf32, #tpu.memory_space<vmem>>, vector<1x16xf32>
      %120 = vector.shape_cast %119 : vector<1x16xf32> to vector<16xf32>
      %c1_75 = arith.constant 1 : index
      %c267_76 = arith.constant 267 : index
      %121 = vector.load %arg8[%c1_75, %c267_76] : memref<2x512xf32, #tpu.memory_space<vmem>>, vector<1x16xf32>
      %122 = vector.shape_cast %121 : vector<1x16xf32> to vector<16xf32>
      %123 = vector.shape_cast %120 : vector<16xf32> to vector<1x16xf32>
      tpu.vector_store %arg8[%c1_75, %c267_76], %123 {strides = array<i32>} : memref<2x512xf32, #tpu.memory_space<vmem>>, vector<1x16xf32>,
      %c0_77 = arith.constant 0 : index
      %c160 = arith.constant 160 : index
      %124 = vector.load %arg6[%c0_77, %c160] : memref<1x256xf32, #tpu.memory_space<vmem>>, vector<1x16xf32>
      %125 = vector.shape_cast %124 : vector<1x16xf32> to vector<16xf32>
      %c0_78 = arith.constant 0 : index
      %c289 = arith.constant 289 : index
      %126 = vector.load %arg8[%c0_78, %c289] : memref<2x512xf32, #tpu.memory_space<vmem>>, vector<1x16xf32>
      %127 = vector.shape_cast %126 : vector<1x16xf32> to vector<16xf32>
      %128 = vector.shape_cast %125 : vector<16xf32> to vector<1x16xf32>
      tpu.vector_store %arg8[%c0_78, %c289], %128 {strides = array<i32>} : memref<2x512xf32, #tpu.memory_space<vmem>>, vector<1x16xf32>,
      %c0_79 = arith.constant 0 : index
      %c160_80 = arith.constant 160 : index
      %129 = vector.load %arg7[%c0_79, %c160_80] : memref<1x256xf32, #tpu.memory_space<vmem>>, vector<1x16xf32>
      %130 = vector.shape_cast %129 : vector<1x16xf32> to vector<16xf32>
      %c1_81 = arith.constant 1 : index
      %c289_82 = arith.constant 289 : index
      %131 = vector.load %arg8[%c1_81, %c289_82] : memref<2x512xf32, #tpu.memory_space<vmem>>, vector<1x16xf32>
      %132 = vector.shape_cast %131 : vector<1x16xf32> to vector<16xf32>
      %133 = vector.shape_cast %130 : vector<16xf32> to vector<1x16xf32>
      tpu.vector_store %arg8[%c1_81, %c289_82], %133 {strides = array<i32>} : memref<2x512xf32, #tpu.memory_space<vmem>>, vector<1x16xf32>,
      %c0_83 = arith.constant 0 : index
      %c176 = arith.constant 176 : index
      %134 = vector.load %arg6[%c0_83, %c176] : memref<1x256xf32, #tpu.memory_space<vmem>>, vector<1x16xf32>
      %135 = vector.shape_cast %134 : vector<1x16xf32> to vector<16xf32>
      %c0_84 = arith.constant 0 : index
      %c311 = arith.constant 311 : index
      %136 = vector.load %arg8[%c0_84, %c311] : memref<2x512xf32, #tpu.memory_space<vmem>>, vector<1x16xf32>
      %137 = vector.shape_cast %136 : vector<1x16xf32> to vector<16xf32>
      %138 = vector.shape_cast %135 : vector<16xf32> to vector<1x16xf32>
      tpu.vector_store %arg8[%c0_84, %c311], %138 {strides = array<i32>} : memref<2x512xf32, #tpu.memory_space<vmem>>, vector<1x16xf32>,
      %c0_85 = arith.constant 0 : index
      %c176_86 = arith.constant 176 : index
      %139 = vector.load %arg7[%c0_85, %c176_86] : memref<1x256xf32, #tpu.memory_space<vmem>>, vector<1x16xf32>
      %140 = vector.shape_cast %139 : vector<1x16xf32> to vector<16xf32>
      %c1_87 = arith.constant 1 : index
      %c311_88 = arith.constant 311 : index
      %141 = vector.load %arg8[%c1_87, %c311_88] : memref<2x512xf32, #tpu.memory_space<vmem>>, vector<1x16xf32>
      %142 = vector.shape_cast %141 : vector<1x16xf32> to vector<16xf32>
      %143 = vector.shape_cast %140 : vector<16xf32> to vector<1x16xf32>
      tpu.vector_store %arg8[%c1_87, %c311_88], %143 {strides = array<i32>} : memref<2x512xf32, #tpu.memory_space<vmem>>, vector<1x16xf32>,
      %c0_89 = arith.constant 0 : index
      %c192 = arith.constant 192 : index
      %144 = vector.load %arg6[%c0_89, %c192] : memref<1x256xf32, #tpu.memory_space<vmem>>, vector<1x16xf32>
      %145 = vector.shape_cast %144 : vector<1x16xf32> to vector<16xf32>
      %c0_90 = arith.constant 0 : index
      %c333 = arith.constant 333 : index
      %146 = vector.load %arg8[%c0_90, %c333] : memref<2x512xf32, #tpu.memory_space<vmem>>, vector<1x16xf32>
      %147 = vector.shape_cast %146 : vector<1x16xf32> to vector<16xf32>
      %148 = vector.shape_cast %145 : vector<16xf32> to vector<1x16xf32>
      tpu.vector_store %arg8[%c0_90, %c333], %148 {strides = array<i32>} : memref<2x512xf32, #tpu.memory_space<vmem>>, vector<1x16xf32>,
      %c0_91 = arith.constant 0 : index
      %c192_92 = arith.constant 192 : index
      %149 = vector.load %arg7[%c0_91, %c192_92] : memref<1x256xf32, #tpu.memory_space<vmem>>, vector<1x16xf32>
      %150 = vector.shape_cast %149 : vector<1x16xf32> to vector<16xf32>
      %c1_93 = arith.constant 1 : index
      %c333_94 = arith.constant 333 : index
      %151 = vector.load %arg8[%c1_93, %c333_94] : memref<2x512xf32, #tpu.memory_space<vmem>>, vector<1x16xf32>
      %152 = vector.shape_cast %151 : vector<1x16xf32> to vector<16xf32>
      %153 = vector.shape_cast %150 : vector<16xf32> to vector<1x16xf32>
      tpu.vector_store %arg8[%c1_93, %c333_94], %153 {strides = array<i32>} : memref<2x512xf32, #tpu.memory_space<vmem>>, vector<1x16xf32>,
      %c0_95 = arith.constant 0 : index
      %c208 = arith.constant 208 : index
      %154 = vector.load %arg6[%c0_95, %c208] : memref<1x256xf32, #tpu.memory_space<vmem>>, vector<1x16xf32>
      %155 = vector.shape_cast %154 : vector<1x16xf32> to vector<16xf32>
      %c0_96 = arith.constant 0 : index
      %c355 = arith.constant 355 : index
      %156 = vector.load %arg8[%c0_96, %c355] : memref<2x512xf32, #tpu.memory_space<vmem>>, vector<1x16xf32>
      %157 = vector.shape_cast %156 : vector<1x16xf32> to vector<16xf32>
      %158 = vector.shape_cast %155 : vector<16xf32> to vector<1x16xf32>
      tpu.vector_store %arg8[%c0_96, %c355], %158 {strides = array<i32>} : memref<2x512xf32, #tpu.memory_space<vmem>>, vector<1x16xf32>,
      %c0_97 = arith.constant 0 : index
      %c208_98 = arith.constant 208 : index
      %159 = vector.load %arg7[%c0_97, %c208_98] : memref<1x256xf32, #tpu.memory_space<vmem>>, vector<1x16xf32>
      %160 = vector.shape_cast %159 : vector<1x16xf32> to vector<16xf32>
      %c1_99 = arith.constant 1 : index
      %c355_100 = arith.constant 355 : index
      %161 = vector.load %arg8[%c1_99, %c355_100] : memref<2x512xf32, #tpu.memory_space<vmem>>, vector<1x16xf32>
      %162 = vector.shape_cast %161 : vector<1x16xf32> to vector<16xf32>
      %163 = vector.shape_cast %160 : vector<16xf32> to vector<1x16xf32>
      tpu.vector_store %arg8[%c1_99, %c355_100], %163 {strides = array<i32>} : memref<2x512xf32, #tpu.memory_space<vmem>>, vector<1x16xf32>,
      %c0_101 = arith.constant 0 : index
      %c224 = arith.constant 224 : index
      %164 = vector.load %arg6[%c0_101, %c224] : memref<1x256xf32, #tpu.memory_space<vmem>>, vector<1x16xf32>
      %165 = vector.shape_cast %164 : vector<1x16xf32> to vector<16xf32>
      %c0_102 = arith.constant 0 : index
      %c377 = arith.constant 377 : index
      %166 = vector.load %arg8[%c0_102, %c377] : memref<2x512xf32, #tpu.memory_space<vmem>>, vector<1x16xf32>
      %167 = vector.shape_cast %166 : vector<1x16xf32> to vector<16xf32>
      %168 = vector.shape_cast %165 : vector<16xf32> to vector<1x16xf32>
      tpu.vector_store %arg8[%c0_102, %c377], %168 {strides = array<i32>} : memref<2x512xf32, #tpu.memory_space<vmem>>, vector<1x16xf32>,
      %c0_103 = arith.constant 0 : index
      %c224_104 = arith.constant 224 : index
      %169 = vector.load %arg7[%c0_103, %c224_104] : memref<1x256xf32, #tpu.memory_space<vmem>>, vector<1x16xf32>
      %170 = vector.shape_cast %169 : vector<1x16xf32> to vector<16xf32>
      %c1_105 = arith.constant 1 : index
      %c377_106 = arith.constant 377 : index
      %171 = vector.load %arg8[%c1_105, %c377_106] : memref<2x512xf32, #tpu.memory_space<vmem>>, vector<1x16xf32>
      %172 = vector.shape_cast %171 : vector<1x16xf32> to vector<16xf32>
      %173 = vector.shape_cast %170 : vector<16xf32> to vector<1x16xf32>
      tpu.vector_store %arg8[%c1_105, %c377_106], %173 {strides = array<i32>} : memref<2x512xf32, #tpu.memory_space<vmem>>, vector<1x16xf32>,
      %c0_107 = arith.constant 0 : index
      %c240 = arith.constant 240 : index
      %174 = vector.load %arg6[%c0_107, %c240] : memref<1x256xf32, #tpu.memory_space<vmem>>, vector<1x16xf32>
      %175 = vector.shape_cast %174 : vector<1x16xf32> to vector<16xf32>
      %c0_108 = arith.constant 0 : index
      %c399 = arith.constant 399 : index
      %176 = vector.load %arg8[%c0_108, %c399] : memref<2x512xf32, #tpu.memory_space<vmem>>, vector<1x16xf32>
      %177 = vector.shape_cast %176 : vector<1x16xf32> to vector<16xf32>
      %178 = vector.shape_cast %175 : vector<16xf32> to vector<1x16xf32>
      tpu.vector_store %arg8[%c0_108, %c399], %178 {strides = array<i32>} : memref<2x512xf32, #tpu.memory_space<vmem>>, vector<1x16xf32>,
      %c0_109 = arith.constant 0 : index
      %c240_110 = arith.constant 240 : index
      %179 = vector.load %arg7[%c0_109, %c240_110] : memref<1x256xf32, #tpu.memory_space<vmem>>, vector<1x16xf32>
      %180 = vector.shape_cast %179 : vector<1x16xf32> to vector<16xf32>
      %c1_111 = arith.constant 1 : index
      %c399_112 = arith.constant 399 : index
      %181 = vector.load %arg8[%c1_111, %c399_112] : memref<2x512xf32, #tpu.memory_space<vmem>>, vector<1x16xf32>
      %182 = vector.shape_cast %181 : vector<1x16xf32> to vector<16xf32>
      %183 = vector.shape_cast %180 : vector<16xf32> to vector<1x16xf32>
      tpu.vector_store %arg8[%c1_111, %c399_112], %183 {strides = array<i32>} : memref<2x512xf32, #tpu.memory_space<vmem>>, vector<1x16xf32>,
      %c0_113 = arith.constant 0 : index
      %184 = memref.load %arg3[%c0_113] : memref<1xf32, #tpu.memory_space<smem>>
      %185 = vector.broadcast %184 : f32 to vector<352xf32>
      %c0_114 = arith.constant 0 : index
      %c0_115 = arith.constant 0 : index
      %186 = vector.load %arg8[%c0_114, %c0_115] : memref<2x512xf32, #tpu.memory_space<vmem>>, vector<1x352xf32>
      %187 = vector.shape_cast %186 : vector<1x352xf32> to vector<352xf32>
      %c0_116 = arith.constant 0 : index
      %188 = memref.load %arg2[%c0_116] : memref<98xf32, #tpu.memory_space<smem>>
      %189 = vector.broadcast %188 : f32 to vector<352xf32>
      %190 = arith.mulf %189, %187 : vector<352xf32>
      %191 = arith.addf %185, %190 : vector<352xf32>
      %c0_117 = arith.constant 0 : index
      %c1_118 = arith.constant 1 : index
      %192 = vector.load %arg8[%c0_117, %c1_118] : memref<2x512xf32, #tpu.memory_space<vmem>>, vector<1x352xf32>
      %193 = vector.shape_cast %192 : vector<1x352xf32> to vector<352xf32>
      %c1_119 = arith.constant 1 : index
      %194 = memref.load %arg2[%c1_119] : memref<98xf32, #tpu.memory_space<smem>>
      %195 = vector.broadcast %194 : f32 to vector<352xf32>
      %196 = arith.mulf %195, %193 : vector<352xf32>
      %197 = arith.addf %191, %196 : vector<352xf32>
      %c0_120 = arith.constant 0 : index
      %c2 = arith.constant 2 : index
      %198 = vector.load %arg8[%c0_120, %c2] : memref<2x512xf32, #tpu.memory_space<vmem>>, vector<1x352xf32>
      %199 = vector.shape_cast %198 : vector<1x352xf32> to vector<352xf32>
      %c2_121 = arith.constant 2 : index
      %200 = memref.load %arg2[%c2_121] : memref<98xf32, #tpu.memory_space<smem>>
      %201 = vector.broadcast %200 : f32 to vector<352xf32>
      %202 = arith.mulf %201, %199 : vector<352xf32>
      %203 = arith.addf %197, %202 : vector<352xf32>
      %c0_122 = arith.constant 0 : index
      %c3 = arith.constant 3 : index
      %204 = vector.load %arg8[%c0_122, %c3] : memref<2x512xf32, #tpu.memory_space<vmem>>, vector<1x352xf32>
      %205 = vector.shape_cast %204 : vector<1x352xf32> to vector<352xf32>
      %c3_123 = arith.constant 3 : index
      %206 = memref.load %arg2[%c3_123] : memref<98xf32, #tpu.memory_space<smem>>
      %207 = vector.broadcast %206 : f32 to vector<352xf32>
      %208 = arith.mulf %207, %205 : vector<352xf32>
      %209 = arith.addf %203, %208 : vector<352xf32>
      %c0_124 = arith.constant 0 : index
      %c4 = arith.constant 4 : index
      %210 = vector.load %arg8[%c0_124, %c4] : memref<2x512xf32, #tpu.memory_space<vmem>>, vector<1x352xf32>
      %211 = vector.shape_cast %210 : vector<1x352xf32> to vector<352xf32>
      %c4_125 = arith.constant 4 : index
      %212 = memref.load %arg2[%c4_125] : memref<98xf32, #tpu.memory_space<smem>>
      %213 = vector.broadcast %212 : f32 to vector<352xf32>
      %214 = arith.mulf %213, %211 : vector<352xf32>
      %215 = arith.addf %209, %214 : vector<352xf32>
      %c0_126 = arith.constant 0 : index
      %c5 = arith.constant 5 : index
      %216 = vector.load %arg8[%c0_126, %c5] : memref<2x512xf32, #tpu.memory_space<vmem>>, vector<1x352xf32>
      %217 = vector.shape_cast %216 : vector<1x352xf32> to vector<352xf32>
      %c5_127 = arith.constant 5 : index
      %218 = memref.load %arg2[%c5_127] : memref<98xf32, #tpu.memory_space<smem>>
      %219 = vector.broadcast %218 : f32 to vector<352xf32>
      %220 = arith.mulf %219, %217 : vector<352xf32>
      %221 = arith.addf %215, %220 : vector<352xf32>
      %c0_128 = arith.constant 0 : index
      %c6 = arith.constant 6 : index
      %222 = vector.load %arg8[%c0_128, %c6] : memref<2x512xf32, #tpu.memory_space<vmem>>, vector<1x352xf32>
      %223 = vector.shape_cast %222 : vector<1x352xf32> to vector<352xf32>
      %c6_129 = arith.constant 6 : index
      %224 = memref.load %arg2[%c6_129] : memref<98xf32, #tpu.memory_space<smem>>
      %225 = vector.broadcast %224 : f32 to vector<352xf32>
      %226 = arith.mulf %225, %223 : vector<352xf32>
      %227 = arith.addf %221, %226 : vector<352xf32>
      %c0_130 = arith.constant 0 : index
      %c22 = arith.constant 22 : index
      %228 = vector.load %arg8[%c0_130, %c22] : memref<2x512xf32, #tpu.memory_space<vmem>>, vector<1x352xf32>
      %229 = vector.shape_cast %228 : vector<1x352xf32> to vector<352xf32>
      %c7 = arith.constant 7 : index
      %230 = memref.load %arg2[%c7] : memref<98xf32, #tpu.memory_space<smem>>
      %231 = vector.broadcast %230 : f32 to vector<352xf32>
      %232 = arith.mulf %231, %229 : vector<352xf32>
      %233 = arith.addf %227, %232 : vector<352xf32>
      %c0_131 = arith.constant 0 : index
      %c23 = arith.constant 23 : index
      %234 = vector.load %arg8[%c0_131, %c23] : memref<2x512xf32, #tpu.memory_space<vmem>>, vector<1x352xf32>
      %235 = vector.shape_cast %234 : vector<1x352xf32> to vector<352xf32>
      %c8 = arith.constant 8 : index
      %236 = memref.load %arg2[%c8] : memref<98xf32, #tpu.memory_space<smem>>
      %237 = vector.broadcast %236 : f32 to vector<352xf32>
      %238 = arith.mulf %237, %235 : vector<352xf32>
      %239 = arith.addf %233, %238 : vector<352xf32>
      %c0_132 = arith.constant 0 : index
      %c24 = arith.constant 24 : index
      %240 = vector.load %arg8[%c0_132, %c24] : memref<2x512xf32, #tpu.memory_space<vmem>>, vector<1x352xf32>
      %241 = vector.shape_cast %240 : vector<1x352xf32> to vector<352xf32>
      %c9 = arith.constant 9 : index
      %242 = memref.load %arg2[%c9] : memref<98xf32, #tpu.memory_space<smem>>
      %243 = vector.broadcast %242 : f32 to vector<352xf32>
      %244 = arith.mulf %243, %241 : vector<352xf32>
      %245 = arith.addf %239, %244 : vector<352xf32>
      %c0_133 = arith.constant 0 : index
      %c25 = arith.constant 25 : index
      %246 = vector.load %arg8[%c0_133, %c25] : memref<2x512xf32, #tpu.memory_space<vmem>>, vector<1x352xf32>
      %247 = vector.shape_cast %246 : vector<1x352xf32> to vector<352xf32>
      %c10 = arith.constant 10 : index
      %248 = memref.load %arg2[%c10] : memref<98xf32, #tpu.memory_space<smem>>
      %249 = vector.broadcast %248 : f32 to vector<352xf32>
      %250 = arith.mulf %249, %247 : vector<352xf32>
      %251 = arith.addf %245, %250 : vector<352xf32>
      %c0_134 = arith.constant 0 : index
      %c26 = arith.constant 26 : index
      %252 = vector.load %arg8[%c0_134, %c26] : memref<2x512xf32, #tpu.memory_space<vmem>>, vector<1x352xf32>
      %253 = vector.shape_cast %252 : vector<1x352xf32> to vector<352xf32>
      %c11 = arith.constant 11 : index
      %254 = memref.load %arg2[%c11] : memref<98xf32, #tpu.memory_space<smem>>
      %255 = vector.broadcast %254 : f32 to vector<352xf32>
      %256 = arith.mulf %255, %253 : vector<352xf32>
      %257 = arith.addf %251, %256 : vector<352xf32>
      %c0_135 = arith.constant 0 : index
      %c27 = arith.constant 27 : index
      %258 = vector.load %arg8[%c0_135, %c27] : memref<2x512xf32, #tpu.memory_space<vmem>>, vector<1x352xf32>
      %259 = vector.shape_cast %258 : vector<1x352xf32> to vector<352xf32>
      %c12 = arith.constant 12 : index
      %260 = memref.load %arg2[%c12] : memref<98xf32, #tpu.memory_space<smem>>
      %261 = vector.broadcast %260 : f32 to vector<352xf32>
      %262 = arith.mulf %261, %259 : vector<352xf32>
      %263 = arith.addf %257, %262 : vector<352xf32>
      %c0_136 = arith.constant 0 : index
      %c28 = arith.constant 28 : index
      %264 = vector.load %arg8[%c0_136, %c28] : memref<2x512xf32, #tpu.memory_space<vmem>>, vector<1x352xf32>
      %265 = vector.shape_cast %264 : vector<1x352xf32> to vector<352xf32>
      %c13 = arith.constant 13 : index
      %266 = memref.load %arg2[%c13] : memref<98xf32, #tpu.memory_space<smem>>
      %267 = vector.broadcast %266 : f32 to vector<352xf32>
      %268 = arith.mulf %267, %265 : vector<352xf32>
      %269 = arith.addf %263, %268 : vector<352xf32>
      %c0_137 = arith.constant 0 : index
      %c44 = arith.constant 44 : index
      %270 = vector.load %arg8[%c0_137, %c44] : memref<2x512xf32, #tpu.memory_space<vmem>>, vector<1x352xf32>
      %271 = vector.shape_cast %270 : vector<1x352xf32> to vector<352xf32>
      %c14 = arith.constant 14 : index
      %272 = memref.load %arg2[%c14] : memref<98xf32, #tpu.memory_space<smem>>
      %273 = vector.broadcast %272 : f32 to vector<352xf32>
      %274 = arith.mulf %273, %271 : vector<352xf32>
      %275 = arith.addf %269, %274 : vector<352xf32>
      %c0_138 = arith.constant 0 : index
      %c45 = arith.constant 45 : index
      %276 = vector.load %arg8[%c0_138, %c45] : memref<2x512xf32, #tpu.memory_space<vmem>>, vector<1x352xf32>
      %277 = vector.shape_cast %276 : vector<1x352xf32> to vector<352xf32>
      %c15 = arith.constant 15 : index
      %278 = memref.load %arg2[%c15] : memref<98xf32, #tpu.memory_space<smem>>
      %279 = vector.broadcast %278 : f32 to vector<352xf32>
      %280 = arith.mulf %279, %277 : vector<352xf32>
      %281 = arith.addf %275, %280 : vector<352xf32>
      %c0_139 = arith.constant 0 : index
      %c46 = arith.constant 46 : index
      %282 = vector.load %arg8[%c0_139, %c46] : memref<2x512xf32, #tpu.memory_space<vmem>>, vector<1x352xf32>
      %283 = vector.shape_cast %282 : vector<1x352xf32> to vector<352xf32>
      %c16_140 = arith.constant 16 : index
      %284 = memref.load %arg2[%c16_140] : memref<98xf32, #tpu.memory_space<smem>>
      %285 = vector.broadcast %284 : f32 to vector<352xf32>
      %286 = arith.mulf %285, %283 : vector<352xf32>
      %287 = arith.addf %281, %286 : vector<352xf32>
      %c0_141 = arith.constant 0 : index
      %c47 = arith.constant 47 : index
      %288 = vector.load %arg8[%c0_141, %c47] : memref<2x512xf32, #tpu.memory_space<vmem>>, vector<1x352xf32>
      %289 = vector.shape_cast %288 : vector<1x352xf32> to vector<352xf32>
      %c17 = arith.constant 17 : index
      %290 = memref.load %arg2[%c17] : memref<98xf32, #tpu.memory_space<smem>>
      %291 = vector.broadcast %290 : f32 to vector<352xf32>
      %292 = arith.mulf %291, %289 : vector<352xf32>
      %293 = arith.addf %287, %292 : vector<352xf32>
      %c0_142 = arith.constant 0 : index
      %c48_143 = arith.constant 48 : index
      %294 = vector.load %arg8[%c0_142, %c48_143] : memref<2x512xf32, #tpu.memory_space<vmem>>, vector<1x352xf32>
      %295 = vector.shape_cast %294 : vector<1x352xf32> to vector<352xf32>
      %c18 = arith.constant 18 : index
      %296 = memref.load %arg2[%c18] : memref<98xf32, #tpu.memory_space<smem>>
      %297 = vector.broadcast %296 : f32 to vector<352xf32>
      %298 = arith.mulf %297, %295 : vector<352xf32>
      %299 = arith.addf %293, %298 : vector<352xf32>
      %c0_144 = arith.constant 0 : index
      %c49 = arith.constant 49 : index
      %300 = vector.load %arg8[%c0_144, %c49] : memref<2x512xf32, #tpu.memory_space<vmem>>, vector<1x352xf32>
      %301 = vector.shape_cast %300 : vector<1x352xf32> to vector<352xf32>
      %c19 = arith.constant 19 : index
      %302 = memref.load %arg2[%c19] : memref<98xf32, #tpu.memory_space<smem>>
      %303 = vector.broadcast %302 : f32 to vector<352xf32>
      %304 = arith.mulf %303, %301 : vector<352xf32>
      %305 = arith.addf %299, %304 : vector<352xf32>
      %c0_145 = arith.constant 0 : index
      %c50 = arith.constant 50 : index
      %306 = vector.load %arg8[%c0_145, %c50] : memref<2x512xf32, #tpu.memory_space<vmem>>, vector<1x352xf32>
      %307 = vector.shape_cast %306 : vector<1x352xf32> to vector<352xf32>
      %c20 = arith.constant 20 : index
      %308 = memref.load %arg2[%c20] : memref<98xf32, #tpu.memory_space<smem>>
      %309 = vector.broadcast %308 : f32 to vector<352xf32>
      %310 = arith.mulf %309, %307 : vector<352xf32>
      %311 = arith.addf %305, %310 : vector<352xf32>
      %c0_146 = arith.constant 0 : index
      %c66 = arith.constant 66 : index
      %312 = vector.load %arg8[%c0_146, %c66] : memref<2x512xf32, #tpu.memory_space<vmem>>, vector<1x352xf32>
      %313 = vector.shape_cast %312 : vector<1x352xf32> to vector<352xf32>
      %c21 = arith.constant 21 : index
      %314 = memref.load %arg2[%c21] : memref<98xf32, #tpu.memory_space<smem>>
      %315 = vector.broadcast %314 : f32 to vector<352xf32>
      %316 = arith.mulf %315, %313 : vector<352xf32>
      %317 = arith.addf %311, %316 : vector<352xf32>
      %c0_147 = arith.constant 0 : index
      %c67 = arith.constant 67 : index
      %318 = vector.load %arg8[%c0_147, %c67] : memref<2x512xf32, #tpu.memory_space<vmem>>, vector<1x352xf32>
      %319 = vector.shape_cast %318 : vector<1x352xf32> to vector<352xf32>
      %c22_148 = arith.constant 22 : index
      %320 = memref.load %arg2[%c22_148] : memref<98xf32, #tpu.memory_space<smem>>
      %321 = vector.broadcast %320 : f32 to vector<352xf32>
      %322 = arith.mulf %321, %319 : vector<352xf32>
      %323 = arith.addf %317, %322 : vector<352xf32>
      %c0_149 = arith.constant 0 : index
      %c68 = arith.constant 68 : index
      %324 = vector.load %arg8[%c0_149, %c68] : memref<2x512xf32, #tpu.memory_space<vmem>>, vector<1x352xf32>
      %325 = vector.shape_cast %324 : vector<1x352xf32> to vector<352xf32>
      %c23_150 = arith.constant 23 : index
      %326 = memref.load %arg2[%c23_150] : memref<98xf32, #tpu.memory_space<smem>>
      %327 = vector.broadcast %326 : f32 to vector<352xf32>
      %328 = arith.mulf %327, %325 : vector<352xf32>
      %329 = arith.addf %323, %328 : vector<352xf32>
      %c0_151 = arith.constant 0 : index
      %c69_152 = arith.constant 69 : index
      %330 = vector.load %arg8[%c0_151, %c69_152] : memref<2x512xf32, #tpu.memory_space<vmem>>, vector<1x352xf32>
      %331 = vector.shape_cast %330 : vector<1x352xf32> to vector<352xf32>
      %c24_153 = arith.constant 24 : index
      %332 = memref.load %arg2[%c24_153] : memref<98xf32, #tpu.memory_space<smem>>
      %333 = vector.broadcast %332 : f32 to vector<352xf32>
      %334 = arith.mulf %333, %331 : vector<352xf32>
      %335 = arith.addf %329, %334 : vector<352xf32>
      %c0_154 = arith.constant 0 : index
      %c70 = arith.constant 70 : index
      %336 = vector.load %arg8[%c0_154, %c70] : memref<2x512xf32, #tpu.memory_space<vmem>>, vector<1x352xf32>
      %337 = vector.shape_cast %336 : vector<1x352xf32> to vector<352xf32>
      %c25_155 = arith.constant 25 : index
      %338 = memref.load %arg2[%c25_155] : memref<98xf32, #tpu.memory_space<smem>>
      %339 = vector.broadcast %338 : f32 to vector<352xf32>
      %340 = arith.mulf %339, %337 : vector<352xf32>
      %341 = arith.addf %335, %340 : vector<352xf32>
      %c0_156 = arith.constant 0 : index
      %c71 = arith.constant 71 : index
      %342 = vector.load %arg8[%c0_156, %c71] : memref<2x512xf32, #tpu.memory_space<vmem>>, vector<1x352xf32>
      %343 = vector.shape_cast %342 : vector<1x352xf32> to vector<352xf32>
      %c26_157 = arith.constant 26 : index
      %344 = memref.load %arg2[%c26_157] : memref<98xf32, #tpu.memory_space<smem>>
      %345 = vector.broadcast %344 : f32 to vector<352xf32>
      %346 = arith.mulf %345, %343 : vector<352xf32>
      %347 = arith.addf %341, %346 : vector<352xf32>
      %c0_158 = arith.constant 0 : index
      %c72 = arith.constant 72 : index
      %348 = vector.load %arg8[%c0_158, %c72] : memref<2x512xf32, #tpu.memory_space<vmem>>, vector<1x352xf32>
      %349 = vector.shape_cast %348 : vector<1x352xf32> to vector<352xf32>
      %c27_159 = arith.constant 27 : index
      %350 = memref.load %arg2[%c27_159] : memref<98xf32, #tpu.memory_space<smem>>
      %351 = vector.broadcast %350 : f32 to vector<352xf32>
      %352 = arith.mulf %351, %349 : vector<352xf32>
      %353 = arith.addf %347, %352 : vector<352xf32>
      %c0_160 = arith.constant 0 : index
      %c88 = arith.constant 88 : index
      %354 = vector.load %arg8[%c0_160, %c88] : memref<2x512xf32, #tpu.memory_space<vmem>>, vector<1x352xf32>
      %355 = vector.shape_cast %354 : vector<1x352xf32> to vector<352xf32>
      %c28_161 = arith.constant 28 : index
      %356 = memref.load %arg2[%c28_161] : memref<98xf32, #tpu.memory_space<smem>>
      %357 = vector.broadcast %356 : f32 to vector<352xf32>
      %358 = arith.mulf %357, %355 : vector<352xf32>
      %359 = arith.addf %353, %358 : vector<352xf32>
      %c0_162 = arith.constant 0 : index
      %c89 = arith.constant 89 : index
      %360 = vector.load %arg8[%c0_162, %c89] : memref<2x512xf32, #tpu.memory_space<vmem>>, vector<1x352xf32>
      %361 = vector.shape_cast %360 : vector<1x352xf32> to vector<352xf32>
      %c29 = arith.constant 29 : index
      %362 = memref.load %arg2[%c29] : memref<98xf32, #tpu.memory_space<smem>>
      %363 = vector.broadcast %362 : f32 to vector<352xf32>
      %364 = arith.mulf %363, %361 : vector<352xf32>
      %365 = arith.addf %359, %364 : vector<352xf32>
      %c0_163 = arith.constant 0 : index
      %c90 = arith.constant 90 : index
      %366 = vector.load %arg8[%c0_163, %c90] : memref<2x512xf32, #tpu.memory_space<vmem>>, vector<1x352xf32>
      %367 = vector.shape_cast %366 : vector<1x352xf32> to vector<352xf32>
      %c30 = arith.constant 30 : index
      %368 = memref.load %arg2[%c30] : memref<98xf32, #tpu.memory_space<smem>>
      %369 = vector.broadcast %368 : f32 to vector<352xf32>
      %370 = arith.mulf %369, %367 : vector<352xf32>
      %371 = arith.addf %365, %370 : vector<352xf32>
      %c0_164 = arith.constant 0 : index
      %c91_165 = arith.constant 91 : index
      %372 = vector.load %arg8[%c0_164, %c91_165] : memref<2x512xf32, #tpu.memory_space<vmem>>, vector<1x352xf32>
      %373 = vector.shape_cast %372 : vector<1x352xf32> to vector<352xf32>
      %c31 = arith.constant 31 : index
      %374 = memref.load %arg2[%c31] : memref<98xf32, #tpu.memory_space<smem>>
      %375 = vector.broadcast %374 : f32 to vector<352xf32>
      %376 = arith.mulf %375, %373 : vector<352xf32>
      %377 = arith.addf %371, %376 : vector<352xf32>
      %c0_166 = arith.constant 0 : index
      %c92 = arith.constant 92 : index
      %378 = vector.load %arg8[%c0_166, %c92] : memref<2x512xf32, #tpu.memory_space<vmem>>, vector<1x352xf32>
      %379 = vector.shape_cast %378 : vector<1x352xf32> to vector<352xf32>
      %c32_167 = arith.constant 32 : index
      %380 = memref.load %arg2[%c32_167] : memref<98xf32, #tpu.memory_space<smem>>
      %381 = vector.broadcast %380 : f32 to vector<352xf32>
      %382 = arith.mulf %381, %379 : vector<352xf32>
      %383 = arith.addf %377, %382 : vector<352xf32>
      %c0_168 = arith.constant 0 : index
      %c93 = arith.constant 93 : index
      %384 = vector.load %arg8[%c0_168, %c93] : memref<2x512xf32, #tpu.memory_space<vmem>>, vector<1x352xf32>
      %385 = vector.shape_cast %384 : vector<1x352xf32> to vector<352xf32>
      %c33 = arith.constant 33 : index
      %386 = memref.load %arg2[%c33] : memref<98xf32, #tpu.memory_space<smem>>
      %387 = vector.broadcast %386 : f32 to vector<352xf32>
      %388 = arith.mulf %387, %385 : vector<352xf32>
      %389 = arith.addf %383, %388 : vector<352xf32>
      %c0_169 = arith.constant 0 : index
      %c94 = arith.constant 94 : index
      %390 = vector.load %arg8[%c0_169, %c94] : memref<2x512xf32, #tpu.memory_space<vmem>>, vector<1x352xf32>
      %391 = vector.shape_cast %390 : vector<1x352xf32> to vector<352xf32>
      %c34 = arith.constant 34 : index
      %392 = memref.load %arg2[%c34] : memref<98xf32, #tpu.memory_space<smem>>
      %393 = vector.broadcast %392 : f32 to vector<352xf32>
      %394 = arith.mulf %393, %391 : vector<352xf32>
      %395 = arith.addf %389, %394 : vector<352xf32>
      %c0_170 = arith.constant 0 : index
      %c110 = arith.constant 110 : index
      %396 = vector.load %arg8[%c0_170, %c110] : memref<2x512xf32, #tpu.memory_space<vmem>>, vector<1x352xf32>
      %397 = vector.shape_cast %396 : vector<1x352xf32> to vector<352xf32>
      %c35 = arith.constant 35 : index
      %398 = memref.load %arg2[%c35] : memref<98xf32, #tpu.memory_space<smem>>
      %399 = vector.broadcast %398 : f32 to vector<352xf32>
      %400 = arith.mulf %399, %397 : vector<352xf32>
      %401 = arith.addf %395, %400 : vector<352xf32>
      %c0_171 = arith.constant 0 : index
      %c111 = arith.constant 111 : index
      %402 = vector.load %arg8[%c0_171, %c111] : memref<2x512xf32, #tpu.memory_space<vmem>>, vector<1x352xf32>
      %403 = vector.shape_cast %402 : vector<1x352xf32> to vector<352xf32>
      %c36 = arith.constant 36 : index
      %404 = memref.load %arg2[%c36] : memref<98xf32, #tpu.memory_space<smem>>
      %405 = vector.broadcast %404 : f32 to vector<352xf32>
      %406 = arith.mulf %405, %403 : vector<352xf32>
      %407 = arith.addf %401, %406 : vector<352xf32>
      %c0_172 = arith.constant 0 : index
      %c112_173 = arith.constant 112 : index
      %408 = vector.load %arg8[%c0_172, %c112_173] : memref<2x512xf32, #tpu.memory_space<vmem>>, vector<1x352xf32>
      %409 = vector.shape_cast %408 : vector<1x352xf32> to vector<352xf32>
      %c37 = arith.constant 37 : index
      %410 = memref.load %arg2[%c37] : memref<98xf32, #tpu.memory_space<smem>>
      %411 = vector.broadcast %410 : f32 to vector<352xf32>
      %412 = arith.mulf %411, %409 : vector<352xf32>
      %413 = arith.addf %407, %412 : vector<352xf32>
      %c0_174 = arith.constant 0 : index
      %c113_175 = arith.constant 113 : index
      %414 = vector.load %arg8[%c0_174, %c113_175] : memref<2x512xf32, #tpu.memory_space<vmem>>, vector<1x352xf32>
      %415 = vector.shape_cast %414 : vector<1x352xf32> to vector<352xf32>
      %c38 = arith.constant 38 : index
      %416 = memref.load %arg2[%c38] : memref<98xf32, #tpu.memory_space<smem>>
      %417 = vector.broadcast %416 : f32 to vector<352xf32>
      %418 = arith.mulf %417, %415 : vector<352xf32>
      %419 = arith.addf %413, %418 : vector<352xf32>
      %c0_176 = arith.constant 0 : index
      %c114 = arith.constant 114 : index
      %420 = vector.load %arg8[%c0_176, %c114] : memref<2x512xf32, #tpu.memory_space<vmem>>, vector<1x352xf32>
      %421 = vector.shape_cast %420 : vector<1x352xf32> to vector<352xf32>
      %c39 = arith.constant 39 : index
      %422 = memref.load %arg2[%c39] : memref<98xf32, #tpu.memory_space<smem>>
      %423 = vector.broadcast %422 : f32 to vector<352xf32>
      %424 = arith.mulf %423, %421 : vector<352xf32>
      %425 = arith.addf %419, %424 : vector<352xf32>
      %c0_177 = arith.constant 0 : index
      %c115 = arith.constant 115 : index
      %426 = vector.load %arg8[%c0_177, %c115] : memref<2x512xf32, #tpu.memory_space<vmem>>, vector<1x352xf32>
      %427 = vector.shape_cast %426 : vector<1x352xf32> to vector<352xf32>
      %c40 = arith.constant 40 : index
      %428 = memref.load %arg2[%c40] : memref<98xf32, #tpu.memory_space<smem>>
      %429 = vector.broadcast %428 : f32 to vector<352xf32>
      %430 = arith.mulf %429, %427 : vector<352xf32>
      %431 = arith.addf %425, %430 : vector<352xf32>
      %c0_178 = arith.constant 0 : index
      %c116 = arith.constant 116 : index
      %432 = vector.load %arg8[%c0_178, %c116] : memref<2x512xf32, #tpu.memory_space<vmem>>, vector<1x352xf32>
      %433 = vector.shape_cast %432 : vector<1x352xf32> to vector<352xf32>
      %c41 = arith.constant 41 : index
      %434 = memref.load %arg2[%c41] : memref<98xf32, #tpu.memory_space<smem>>
      %435 = vector.broadcast %434 : f32 to vector<352xf32>
      %436 = arith.mulf %435, %433 : vector<352xf32>
      %437 = arith.addf %431, %436 : vector<352xf32>
      %c0_179 = arith.constant 0 : index
      %c132 = arith.constant 132 : index
      %438 = vector.load %arg8[%c0_179, %c132] : memref<2x512xf32, #tpu.memory_space<vmem>>, vector<1x352xf32>
      %439 = vector.shape_cast %438 : vector<1x352xf32> to vector<352xf32>
      %c42 = arith.constant 42 : index
      %440 = memref.load %arg2[%c42] : memref<98xf32, #tpu.memory_space<smem>>
      %441 = vector.broadcast %440 : f32 to vector<352xf32>
      %442 = arith.mulf %441, %439 : vector<352xf32>
      %443 = arith.addf %437, %442 : vector<352xf32>
      %c0_180 = arith.constant 0 : index
      %c133 = arith.constant 133 : index
      %444 = vector.load %arg8[%c0_180, %c133] : memref<2x512xf32, #tpu.memory_space<vmem>>, vector<1x352xf32>
      %445 = vector.shape_cast %444 : vector<1x352xf32> to vector<352xf32>
      %c43 = arith.constant 43 : index
      %446 = memref.load %arg2[%c43] : memref<98xf32, #tpu.memory_space<smem>>
      %447 = vector.broadcast %446 : f32 to vector<352xf32>
      %448 = arith.mulf %447, %445 : vector<352xf32>
      %449 = arith.addf %443, %448 : vector<352xf32>
      %c0_181 = arith.constant 0 : index
      %c134 = arith.constant 134 : index
      %450 = vector.load %arg8[%c0_181, %c134] : memref<2x512xf32, #tpu.memory_space<vmem>>, vector<1x352xf32>
      %451 = vector.shape_cast %450 : vector<1x352xf32> to vector<352xf32>
      %c44_182 = arith.constant 44 : index
      %452 = memref.load %arg2[%c44_182] : memref<98xf32, #tpu.memory_space<smem>>
      %453 = vector.broadcast %452 : f32 to vector<352xf32>
      %454 = arith.mulf %453, %451 : vector<352xf32>
      %455 = arith.addf %449, %454 : vector<352xf32>
      %c0_183 = arith.constant 0 : index
      %c135_184 = arith.constant 135 : index
      %456 = vector.load %arg8[%c0_183, %c135_184] : memref<2x512xf32, #tpu.memory_space<vmem>>, vector<1x352xf32>
      %457 = vector.shape_cast %456 : vector<1x352xf32> to vector<352xf32>
      %c45_185 = arith.constant 45 : index
      %458 = memref.load %arg2[%c45_185] : memref<98xf32, #tpu.memory_space<smem>>
      %459 = vector.broadcast %458 : f32 to vector<352xf32>
      %460 = arith.mulf %459, %457 : vector<352xf32>
      %461 = arith.addf %455, %460 : vector<352xf32>
      %c0_186 = arith.constant 0 : index
      %c136 = arith.constant 136 : index
      %462 = vector.load %arg8[%c0_186, %c136] : memref<2x512xf32, #tpu.memory_space<vmem>>, vector<1x352xf32>
      %463 = vector.shape_cast %462 : vector<1x352xf32> to vector<352xf32>
      %c46_187 = arith.constant 46 : index
      %464 = memref.load %arg2[%c46_187] : memref<98xf32, #tpu.memory_space<smem>>
      %465 = vector.broadcast %464 : f32 to vector<352xf32>
      %466 = arith.mulf %465, %463 : vector<352xf32>
      %467 = arith.addf %461, %466 : vector<352xf32>
      %c0_188 = arith.constant 0 : index
      %c137 = arith.constant 137 : index
      %468 = vector.load %arg8[%c0_188, %c137] : memref<2x512xf32, #tpu.memory_space<vmem>>, vector<1x352xf32>
      %469 = vector.shape_cast %468 : vector<1x352xf32> to vector<352xf32>
      %c47_189 = arith.constant 47 : index
      %470 = memref.load %arg2[%c47_189] : memref<98xf32, #tpu.memory_space<smem>>
      %471 = vector.broadcast %470 : f32 to vector<352xf32>
      %472 = arith.mulf %471, %469 : vector<352xf32>
      %473 = arith.addf %467, %472 : vector<352xf32>
      %c0_190 = arith.constant 0 : index
      %c138 = arith.constant 138 : index
      %474 = vector.load %arg8[%c0_190, %c138] : memref<2x512xf32, #tpu.memory_space<vmem>>, vector<1x352xf32>
      %475 = vector.shape_cast %474 : vector<1x352xf32> to vector<352xf32>
      %c48_191 = arith.constant 48 : index
      %476 = memref.load %arg2[%c48_191] : memref<98xf32, #tpu.memory_space<smem>>
      %477 = vector.broadcast %476 : f32 to vector<352xf32>
      %478 = arith.mulf %477, %475 : vector<352xf32>
      %479 = arith.addf %473, %478 : vector<352xf32>
      %c1_192 = arith.constant 1 : index
      %c0_193 = arith.constant 0 : index
      %480 = vector.load %arg8[%c1_192, %c0_193] : memref<2x512xf32, #tpu.memory_space<vmem>>, vector<1x352xf32>
      %481 = vector.shape_cast %480 : vector<1x352xf32> to vector<352xf32>
      %c49_194 = arith.constant 49 : index
      %482 = memref.load %arg2[%c49_194] : memref<98xf32, #tpu.memory_space<smem>>
      %483 = vector.broadcast %482 : f32 to vector<352xf32>
      %484 = arith.mulf %483, %481 : vector<352xf32>
      %485 = arith.addf %479, %484 : vector<352xf32>
      %c1_195 = arith.constant 1 : index
      %c1_196 = arith.constant 1 : index
      %486 = vector.load %arg8[%c1_195, %c1_196] : memref<2x512xf32, #tpu.memory_space<vmem>>, vector<1x352xf32>
      %487 = vector.shape_cast %486 : vector<1x352xf32> to vector<352xf32>
      %c50_197 = arith.constant 50 : index
      %488 = memref.load %arg2[%c50_197] : memref<98xf32, #tpu.memory_space<smem>>
      %489 = vector.broadcast %488 : f32 to vector<352xf32>
      %490 = arith.mulf %489, %487 : vector<352xf32>
      %491 = arith.addf %485, %490 : vector<352xf32>
      %c1_198 = arith.constant 1 : index
      %c2_199 = arith.constant 2 : index
      %492 = vector.load %arg8[%c1_198, %c2_199] : memref<2x512xf32, #tpu.memory_space<vmem>>, vector<1x352xf32>
      %493 = vector.shape_cast %492 : vector<1x352xf32> to vector<352xf32>
      %c51 = arith.constant 51 : index
      %494 = memref.load %arg2[%c51] : memref<98xf32, #tpu.memory_space<smem>>
      %495 = vector.broadcast %494 : f32 to vector<352xf32>
      %496 = arith.mulf %495, %493 : vector<352xf32>
      %497 = arith.addf %491, %496 : vector<352xf32>
      %c1_200 = arith.constant 1 : index
      %c3_201 = arith.constant 3 : index
      %498 = vector.load %arg8[%c1_200, %c3_201] : memref<2x512xf32, #tpu.memory_space<vmem>>, vector<1x352xf32>
      %499 = vector.shape_cast %498 : vector<1x352xf32> to vector<352xf32>
      %c52 = arith.constant 52 : index
      %500 = memref.load %arg2[%c52] : memref<98xf32, #tpu.memory_space<smem>>
      %501 = vector.broadcast %500 : f32 to vector<352xf32>
      %502 = arith.mulf %501, %499 : vector<352xf32>
      %503 = arith.addf %497, %502 : vector<352xf32>
      %c1_202 = arith.constant 1 : index
      %c4_203 = arith.constant 4 : index
      %504 = vector.load %arg8[%c1_202, %c4_203] : memref<2x512xf32, #tpu.memory_space<vmem>>, vector<1x352xf32>
      %505 = vector.shape_cast %504 : vector<1x352xf32> to vector<352xf32>
      %c53 = arith.constant 53 : index
      %506 = memref.load %arg2[%c53] : memref<98xf32, #tpu.memory_space<smem>>
      %507 = vector.broadcast %506 : f32 to vector<352xf32>
      %508 = arith.mulf %507, %505 : vector<352xf32>
      %509 = arith.addf %503, %508 : vector<352xf32>
      %c1_204 = arith.constant 1 : index
      %c5_205 = arith.constant 5 : index
      %510 = vector.load %arg8[%c1_204, %c5_205] : memref<2x512xf32, #tpu.memory_space<vmem>>, vector<1x352xf32>
      %511 = vector.shape_cast %510 : vector<1x352xf32> to vector<352xf32>
      %c54 = arith.constant 54 : index
      %512 = memref.load %arg2[%c54] : memref<98xf32, #tpu.memory_space<smem>>
      %513 = vector.broadcast %512 : f32 to vector<352xf32>
      %514 = arith.mulf %513, %511 : vector<352xf32>
      %515 = arith.addf %509, %514 : vector<352xf32>
      %c1_206 = arith.constant 1 : index
      %c6_207 = arith.constant 6 : index
      %516 = vector.load %arg8[%c1_206, %c6_207] : memref<2x512xf32, #tpu.memory_space<vmem>>, vector<1x352xf32>
      %517 = vector.shape_cast %516 : vector<1x352xf32> to vector<352xf32>
      %c55 = arith.constant 55 : index
      %518 = memref.load %arg2[%c55] : memref<98xf32, #tpu.memory_space<smem>>
      %519 = vector.broadcast %518 : f32 to vector<352xf32>
      %520 = arith.mulf %519, %517 : vector<352xf32>
      %521 = arith.addf %515, %520 : vector<352xf32>
      %c1_208 = arith.constant 1 : index
      %c22_209 = arith.constant 22 : index
      %522 = vector.load %arg8[%c1_208, %c22_209] : memref<2x512xf32, #tpu.memory_space<vmem>>, vector<1x352xf32>
      %523 = vector.shape_cast %522 : vector<1x352xf32> to vector<352xf32>
      %c56 = arith.constant 56 : index
      %524 = memref.load %arg2[%c56] : memref<98xf32, #tpu.memory_space<smem>>
      %525 = vector.broadcast %524 : f32 to vector<352xf32>
      %526 = arith.mulf %525, %523 : vector<352xf32>
      %527 = arith.addf %521, %526 : vector<352xf32>
      %c1_210 = arith.constant 1 : index
      %c23_211 = arith.constant 23 : index
      %528 = vector.load %arg8[%c1_210, %c23_211] : memref<2x512xf32, #tpu.memory_space<vmem>>, vector<1x352xf32>
      %529 = vector.shape_cast %528 : vector<1x352xf32> to vector<352xf32>
      %c57 = arith.constant 57 : index
      %530 = memref.load %arg2[%c57] : memref<98xf32, #tpu.memory_space<smem>>
      %531 = vector.broadcast %530 : f32 to vector<352xf32>
      %532 = arith.mulf %531, %529 : vector<352xf32>
      %533 = arith.addf %527, %532 : vector<352xf32>
      %c1_212 = arith.constant 1 : index
      %c24_213 = arith.constant 24 : index
      %534 = vector.load %arg8[%c1_212, %c24_213] : memref<2x512xf32, #tpu.memory_space<vmem>>, vector<1x352xf32>
      %535 = vector.shape_cast %534 : vector<1x352xf32> to vector<352xf32>
      %c58 = arith.constant 58 : index
      %536 = memref.load %arg2[%c58] : memref<98xf32, #tpu.memory_space<smem>>
      %537 = vector.broadcast %536 : f32 to vector<352xf32>
      %538 = arith.mulf %537, %535 : vector<352xf32>
      %539 = arith.addf %533, %538 : vector<352xf32>
      %c1_214 = arith.constant 1 : index
      %c25_215 = arith.constant 25 : index
      %540 = vector.load %arg8[%c1_214, %c25_215] : memref<2x512xf32, #tpu.memory_space<vmem>>, vector<1x352xf32>
      %541 = vector.shape_cast %540 : vector<1x352xf32> to vector<352xf32>
      %c59 = arith.constant 59 : index
      %542 = memref.load %arg2[%c59] : memref<98xf32, #tpu.memory_space<smem>>
      %543 = vector.broadcast %542 : f32 to vector<352xf32>
      %544 = arith.mulf %543, %541 : vector<352xf32>
      %545 = arith.addf %539, %544 : vector<352xf32>
      %c1_216 = arith.constant 1 : index
      %c26_217 = arith.constant 26 : index
      %546 = vector.load %arg8[%c1_216, %c26_217] : memref<2x512xf32, #tpu.memory_space<vmem>>, vector<1x352xf32>
      %547 = vector.shape_cast %546 : vector<1x352xf32> to vector<352xf32>
      %c60 = arith.constant 60 : index
      %548 = memref.load %arg2[%c60] : memref<98xf32, #tpu.memory_space<smem>>
      %549 = vector.broadcast %548 : f32 to vector<352xf32>
      %550 = arith.mulf %549, %547 : vector<352xf32>
      %551 = arith.addf %545, %550 : vector<352xf32>
      %c1_218 = arith.constant 1 : index
      %c27_219 = arith.constant 27 : index
      %552 = vector.load %arg8[%c1_218, %c27_219] : memref<2x512xf32, #tpu.memory_space<vmem>>, vector<1x352xf32>
      %553 = vector.shape_cast %552 : vector<1x352xf32> to vector<352xf32>
      %c61 = arith.constant 61 : index
      %554 = memref.load %arg2[%c61] : memref<98xf32, #tpu.memory_space<smem>>
      %555 = vector.broadcast %554 : f32 to vector<352xf32>
      %556 = arith.mulf %555, %553 : vector<352xf32>
      %557 = arith.addf %551, %556 : vector<352xf32>
      %c1_220 = arith.constant 1 : index
      %c28_221 = arith.constant 28 : index
      %558 = vector.load %arg8[%c1_220, %c28_221] : memref<2x512xf32, #tpu.memory_space<vmem>>, vector<1x352xf32>
      %559 = vector.shape_cast %558 : vector<1x352xf32> to vector<352xf32>
      %c62 = arith.constant 62 : index
      %560 = memref.load %arg2[%c62] : memref<98xf32, #tpu.memory_space<smem>>
      %561 = vector.broadcast %560 : f32 to vector<352xf32>
      %562 = arith.mulf %561, %559 : vector<352xf32>
      %563 = arith.addf %557, %562 : vector<352xf32>
      %c1_222 = arith.constant 1 : index
      %c44_223 = arith.constant 44 : index
      %564 = vector.load %arg8[%c1_222, %c44_223] : memref<2x512xf32, #tpu.memory_space<vmem>>, vector<1x352xf32>
      %565 = vector.shape_cast %564 : vector<1x352xf32> to vector<352xf32>
      %c63 = arith.constant 63 : index
      %566 = memref.load %arg2[%c63] : memref<98xf32, #tpu.memory_space<smem>>
      %567 = vector.broadcast %566 : f32 to vector<352xf32>
      %568 = arith.mulf %567, %565 : vector<352xf32>
      %569 = arith.addf %563, %568 : vector<352xf32>
      %c1_224 = arith.constant 1 : index
      %c45_225 = arith.constant 45 : index
      %570 = vector.load %arg8[%c1_224, %c45_225] : memref<2x512xf32, #tpu.memory_space<vmem>>, vector<1x352xf32>
      %571 = vector.shape_cast %570 : vector<1x352xf32> to vector<352xf32>
      %c64_226 = arith.constant 64 : index
      %572 = memref.load %arg2[%c64_226] : memref<98xf32, #tpu.memory_space<smem>>
      %573 = vector.broadcast %572 : f32 to vector<352xf32>
      %574 = arith.mulf %573, %571 : vector<352xf32>
      %575 = arith.addf %569, %574 : vector<352xf32>
      %c1_227 = arith.constant 1 : index
      %c46_228 = arith.constant 46 : index
      %576 = vector.load %arg8[%c1_227, %c46_228] : memref<2x512xf32, #tpu.memory_space<vmem>>, vector<1x352xf32>
      %577 = vector.shape_cast %576 : vector<1x352xf32> to vector<352xf32>
      %c65 = arith.constant 65 : index
      %578 = memref.load %arg2[%c65] : memref<98xf32, #tpu.memory_space<smem>>
      %579 = vector.broadcast %578 : f32 to vector<352xf32>
      %580 = arith.mulf %579, %577 : vector<352xf32>
      %581 = arith.addf %575, %580 : vector<352xf32>
      %c1_229 = arith.constant 1 : index
      %c47_230 = arith.constant 47 : index
      %582 = vector.load %arg8[%c1_229, %c47_230] : memref<2x512xf32, #tpu.memory_space<vmem>>, vector<1x352xf32>
      %583 = vector.shape_cast %582 : vector<1x352xf32> to vector<352xf32>
      %c66_231 = arith.constant 66 : index
      %584 = memref.load %arg2[%c66_231] : memref<98xf32, #tpu.memory_space<smem>>
      %585 = vector.broadcast %584 : f32 to vector<352xf32>
      %586 = arith.mulf %585, %583 : vector<352xf32>
      %587 = arith.addf %581, %586 : vector<352xf32>
      %c1_232 = arith.constant 1 : index
      %c48_233 = arith.constant 48 : index
      %588 = vector.load %arg8[%c1_232, %c48_233] : memref<2x512xf32, #tpu.memory_space<vmem>>, vector<1x352xf32>
      %589 = vector.shape_cast %588 : vector<1x352xf32> to vector<352xf32>
      %c67_234 = arith.constant 67 : index
      %590 = memref.load %arg2[%c67_234] : memref<98xf32, #tpu.memory_space<smem>>
      %591 = vector.broadcast %590 : f32 to vector<352xf32>
      %592 = arith.mulf %591, %589 : vector<352xf32>
      %593 = arith.addf %587, %592 : vector<352xf32>
      %c1_235 = arith.constant 1 : index
      %c49_236 = arith.constant 49 : index
      %594 = vector.load %arg8[%c1_235, %c49_236] : memref<2x512xf32, #tpu.memory_space<vmem>>, vector<1x352xf32>
      %595 = vector.shape_cast %594 : vector<1x352xf32> to vector<352xf32>
      %c68_237 = arith.constant 68 : index
      %596 = memref.load %arg2[%c68_237] : memref<98xf32, #tpu.memory_space<smem>>
      %597 = vector.broadcast %596 : f32 to vector<352xf32>
      %598 = arith.mulf %597, %595 : vector<352xf32>
      %599 = arith.addf %593, %598 : vector<352xf32>
      %c1_238 = arith.constant 1 : index
      %c50_239 = arith.constant 50 : index
      %600 = vector.load %arg8[%c1_238, %c50_239] : memref<2x512xf32, #tpu.memory_space<vmem>>, vector<1x352xf32>
      %601 = vector.shape_cast %600 : vector<1x352xf32> to vector<352xf32>
      %c69_240 = arith.constant 69 : index
      %602 = memref.load %arg2[%c69_240] : memref<98xf32, #tpu.memory_space<smem>>
      %603 = vector.broadcast %602 : f32 to vector<352xf32>
      %604 = arith.mulf %603, %601 : vector<352xf32>
      %605 = arith.addf %599, %604 : vector<352xf32>
      %c1_241 = arith.constant 1 : index
      %c66_242 = arith.constant 66 : index
      %606 = vector.load %arg8[%c1_241, %c66_242] : memref<2x512xf32, #tpu.memory_space<vmem>>, vector<1x352xf32>
      %607 = vector.shape_cast %606 : vector<1x352xf32> to vector<352xf32>
      %c70_243 = arith.constant 70 : index
      %608 = memref.load %arg2[%c70_243] : memref<98xf32, #tpu.memory_space<smem>>
      %609 = vector.broadcast %608 : f32 to vector<352xf32>
      %610 = arith.mulf %609, %607 : vector<352xf32>
      %611 = arith.addf %605, %610 : vector<352xf32>
      %c1_244 = arith.constant 1 : index
      %c67_245 = arith.constant 67 : index
      %612 = vector.load %arg8[%c1_244, %c67_245] : memref<2x512xf32, #tpu.memory_space<vmem>>, vector<1x352xf32>
      %613 = vector.shape_cast %612 : vector<1x352xf32> to vector<352xf32>
      %c71_246 = arith.constant 71 : index
      %614 = memref.load %arg2[%c71_246] : memref<98xf32, #tpu.memory_space<smem>>
      %615 = vector.broadcast %614 : f32 to vector<352xf32>
      %616 = arith.mulf %615, %613 : vector<352xf32>
      %617 = arith.addf %611, %616 : vector<352xf32>
      %c1_247 = arith.constant 1 : index
      %c68_248 = arith.constant 68 : index
      %618 = vector.load %arg8[%c1_247, %c68_248] : memref<2x512xf32, #tpu.memory_space<vmem>>, vector<1x352xf32>
      %619 = vector.shape_cast %618 : vector<1x352xf32> to vector<352xf32>
      %c72_249 = arith.constant 72 : index
      %620 = memref.load %arg2[%c72_249] : memref<98xf32, #tpu.memory_space<smem>>
      %621 = vector.broadcast %620 : f32 to vector<352xf32>
      %622 = arith.mulf %621, %619 : vector<352xf32>
      %623 = arith.addf %617, %622 : vector<352xf32>
      %c1_250 = arith.constant 1 : index
      %c69_251 = arith.constant 69 : index
      %624 = vector.load %arg8[%c1_250, %c69_251] : memref<2x512xf32, #tpu.memory_space<vmem>>, vector<1x352xf32>
      %625 = vector.shape_cast %624 : vector<1x352xf32> to vector<352xf32>
      %c73 = arith.constant 73 : index
      %626 = memref.load %arg2[%c73] : memref<98xf32, #tpu.memory_space<smem>>
      %627 = vector.broadcast %626 : f32 to vector<352xf32>
      %628 = arith.mulf %627, %625 : vector<352xf32>
      %629 = arith.addf %623, %628 : vector<352xf32>
      %c1_252 = arith.constant 1 : index
      %c70_253 = arith.constant 70 : index
      %630 = vector.load %arg8[%c1_252, %c70_253] : memref<2x512xf32, #tpu.memory_space<vmem>>, vector<1x352xf32>
      %631 = vector.shape_cast %630 : vector<1x352xf32> to vector<352xf32>
      %c74 = arith.constant 74 : index
      %632 = memref.load %arg2[%c74] : memref<98xf32, #tpu.memory_space<smem>>
      %633 = vector.broadcast %632 : f32 to vector<352xf32>
      %634 = arith.mulf %633, %631 : vector<352xf32>
      %635 = arith.addf %629, %634 : vector<352xf32>
      %c1_254 = arith.constant 1 : index
      %c71_255 = arith.constant 71 : index
      %636 = vector.load %arg8[%c1_254, %c71_255] : memref<2x512xf32, #tpu.memory_space<vmem>>, vector<1x352xf32>
      %637 = vector.shape_cast %636 : vector<1x352xf32> to vector<352xf32>
      %c75 = arith.constant 75 : index
      %638 = memref.load %arg2[%c75] : memref<98xf32, #tpu.memory_space<smem>>
      %639 = vector.broadcast %638 : f32 to vector<352xf32>
      %640 = arith.mulf %639, %637 : vector<352xf32>
      %641 = arith.addf %635, %640 : vector<352xf32>
      %c1_256 = arith.constant 1 : index
      %c72_257 = arith.constant 72 : index
      %642 = vector.load %arg8[%c1_256, %c72_257] : memref<2x512xf32, #tpu.memory_space<vmem>>, vector<1x352xf32>
      %643 = vector.shape_cast %642 : vector<1x352xf32> to vector<352xf32>
      %c76 = arith.constant 76 : index
      %644 = memref.load %arg2[%c76] : memref<98xf32, #tpu.memory_space<smem>>
      %645 = vector.broadcast %644 : f32 to vector<352xf32>
      %646 = arith.mulf %645, %643 : vector<352xf32>
      %647 = arith.addf %641, %646 : vector<352xf32>
      %c1_258 = arith.constant 1 : index
      %c88_259 = arith.constant 88 : index
      %648 = vector.load %arg8[%c1_258, %c88_259] : memref<2x512xf32, #tpu.memory_space<vmem>>, vector<1x352xf32>
      %649 = vector.shape_cast %648 : vector<1x352xf32> to vector<352xf32>
      %c77 = arith.constant 77 : index
      %650 = memref.load %arg2[%c77] : memref<98xf32, #tpu.memory_space<smem>>
      %651 = vector.broadcast %650 : f32 to vector<352xf32>
      %652 = arith.mulf %651, %649 : vector<352xf32>
      %653 = arith.addf %647, %652 : vector<352xf32>
      %c1_260 = arith.constant 1 : index
      %c89_261 = arith.constant 89 : index
      %654 = vector.load %arg8[%c1_260, %c89_261] : memref<2x512xf32, #tpu.memory_space<vmem>>, vector<1x352xf32>
      %655 = vector.shape_cast %654 : vector<1x352xf32> to vector<352xf32>
      %c78 = arith.constant 78 : index
      %656 = memref.load %arg2[%c78] : memref<98xf32, #tpu.memory_space<smem>>
      %657 = vector.broadcast %656 : f32 to vector<352xf32>
      %658 = arith.mulf %657, %655 : vector<352xf32>
      %659 = arith.addf %653, %658 : vector<352xf32>
      %c1_262 = arith.constant 1 : index
      %c90_263 = arith.constant 90 : index
      %660 = vector.load %arg8[%c1_262, %c90_263] : memref<2x512xf32, #tpu.memory_space<vmem>>, vector<1x352xf32>
      %661 = vector.shape_cast %660 : vector<1x352xf32> to vector<352xf32>
      %c79 = arith.constant 79 : index
      %662 = memref.load %arg2[%c79] : memref<98xf32, #tpu.memory_space<smem>>
      %663 = vector.broadcast %662 : f32 to vector<352xf32>
      %664 = arith.mulf %663, %661 : vector<352xf32>
      %665 = arith.addf %659, %664 : vector<352xf32>
      %c1_264 = arith.constant 1 : index
      %c91_265 = arith.constant 91 : index
      %666 = vector.load %arg8[%c1_264, %c91_265] : memref<2x512xf32, #tpu.memory_space<vmem>>, vector<1x352xf32>
      %667 = vector.shape_cast %666 : vector<1x352xf32> to vector<352xf32>
      %c80_266 = arith.constant 80 : index
      %668 = memref.load %arg2[%c80_266] : memref<98xf32, #tpu.memory_space<smem>>
      %669 = vector.broadcast %668 : f32 to vector<352xf32>
      %670 = arith.mulf %669, %667 : vector<352xf32>
      %671 = arith.addf %665, %670 : vector<352xf32>
      %c1_267 = arith.constant 1 : index
      %c92_268 = arith.constant 92 : index
      %672 = vector.load %arg8[%c1_267, %c92_268] : memref<2x512xf32, #tpu.memory_space<vmem>>, vector<1x352xf32>
      %673 = vector.shape_cast %672 : vector<1x352xf32> to vector<352xf32>
      %c81 = arith.constant 81 : index
      %674 = memref.load %arg2[%c81] : memref<98xf32, #tpu.memory_space<smem>>
      %675 = vector.broadcast %674 : f32 to vector<352xf32>
      %676 = arith.mulf %675, %673 : vector<352xf32>
      %677 = arith.addf %671, %676 : vector<352xf32>
      %c1_269 = arith.constant 1 : index
      %c93_270 = arith.constant 93 : index
      %678 = vector.load %arg8[%c1_269, %c93_270] : memref<2x512xf32, #tpu.memory_space<vmem>>, vector<1x352xf32>
      %679 = vector.shape_cast %678 : vector<1x352xf32> to vector<352xf32>
      %c82 = arith.constant 82 : index
      %680 = memref.load %arg2[%c82] : memref<98xf32, #tpu.memory_space<smem>>
      %681 = vector.broadcast %680 : f32 to vector<352xf32>
      %682 = arith.mulf %681, %679 : vector<352xf32>
      %683 = arith.addf %677, %682 : vector<352xf32>
      %c1_271 = arith.constant 1 : index
      %c94_272 = arith.constant 94 : index
      %684 = vector.load %arg8[%c1_271, %c94_272] : memref<2x512xf32, #tpu.memory_space<vmem>>, vector<1x352xf32>
      %685 = vector.shape_cast %684 : vector<1x352xf32> to vector<352xf32>
      %c83 = arith.constant 83 : index
      %686 = memref.load %arg2[%c83] : memref<98xf32, #tpu.memory_space<smem>>
      %687 = vector.broadcast %686 : f32 to vector<352xf32>
      %688 = arith.mulf %687, %685 : vector<352xf32>
      %689 = arith.addf %683, %688 : vector<352xf32>
      %c1_273 = arith.constant 1 : index
      %c110_274 = arith.constant 110 : index
      %690 = vector.load %arg8[%c1_273, %c110_274] : memref<2x512xf32, #tpu.memory_space<vmem>>, vector<1x352xf32>
      %691 = vector.shape_cast %690 : vector<1x352xf32> to vector<352xf32>
      %c84 = arith.constant 84 : index
      %692 = memref.load %arg2[%c84] : memref<98xf32, #tpu.memory_space<smem>>
      %693 = vector.broadcast %692 : f32 to vector<352xf32>
      %694 = arith.mulf %693, %691 : vector<352xf32>
      %695 = arith.addf %689, %694 : vector<352xf32>
      %c1_275 = arith.constant 1 : index
      %c111_276 = arith.constant 111 : index
      %696 = vector.load %arg8[%c1_275, %c111_276] : memref<2x512xf32, #tpu.memory_space<vmem>>, vector<1x352xf32>
      %697 = vector.shape_cast %696 : vector<1x352xf32> to vector<352xf32>
      %c85 = arith.constant 85 : index
      %698 = memref.load %arg2[%c85] : memref<98xf32, #tpu.memory_space<smem>>
      %699 = vector.broadcast %698 : f32 to vector<352xf32>
      %700 = arith.mulf %699, %697 : vector<352xf32>
      %701 = arith.addf %695, %700 : vector<352xf32>
      %c1_277 = arith.constant 1 : index
      %c112_278 = arith.constant 112 : index
      %702 = vector.load %arg8[%c1_277, %c112_278] : memref<2x512xf32, #tpu.memory_space<vmem>>, vector<1x352xf32>
      %703 = vector.shape_cast %702 : vector<1x352xf32> to vector<352xf32>
      %c86 = arith.constant 86 : index
      %704 = memref.load %arg2[%c86] : memref<98xf32, #tpu.memory_space<smem>>
      %705 = vector.broadcast %704 : f32 to vector<352xf32>
      %706 = arith.mulf %705, %703 : vector<352xf32>
      %707 = arith.addf %701, %706 : vector<352xf32>
      %c1_279 = arith.constant 1 : index
      %c113_280 = arith.constant 113 : index
      %708 = vector.load %arg8[%c1_279, %c113_280] : memref<2x512xf32, #tpu.memory_space<vmem>>, vector<1x352xf32>
      %709 = vector.shape_cast %708 : vector<1x352xf32> to vector<352xf32>
      %c87 = arith.constant 87 : index
      %710 = memref.load %arg2[%c87] : memref<98xf32, #tpu.memory_space<smem>>
      %711 = vector.broadcast %710 : f32 to vector<352xf32>
      %712 = arith.mulf %711, %709 : vector<352xf32>
      %713 = arith.addf %707, %712 : vector<352xf32>
      %c1_281 = arith.constant 1 : index
      %c114_282 = arith.constant 114 : index
      %714 = vector.load %arg8[%c1_281, %c114_282] : memref<2x512xf32, #tpu.memory_space<vmem>>, vector<1x352xf32>
      %715 = vector.shape_cast %714 : vector<1x352xf32> to vector<352xf32>
      %c88_283 = arith.constant 88 : index
      %716 = memref.load %arg2[%c88_283] : memref<98xf32, #tpu.memory_space<smem>>
      %717 = vector.broadcast %716 : f32 to vector<352xf32>
      %718 = arith.mulf %717, %715 : vector<352xf32>
      %719 = arith.addf %713, %718 : vector<352xf32>
      %c1_284 = arith.constant 1 : index
      %c115_285 = arith.constant 115 : index
      %720 = vector.load %arg8[%c1_284, %c115_285] : memref<2x512xf32, #tpu.memory_space<vmem>>, vector<1x352xf32>
      %721 = vector.shape_cast %720 : vector<1x352xf32> to vector<352xf32>
      %c89_286 = arith.constant 89 : index
      %722 = memref.load %arg2[%c89_286] : memref<98xf32, #tpu.memory_space<smem>>
      %723 = vector.broadcast %722 : f32 to vector<352xf32>
      %724 = arith.mulf %723, %721 : vector<352xf32>
      %725 = arith.addf %719, %724 : vector<352xf32>
      %c1_287 = arith.constant 1 : index
      %c116_288 = arith.constant 116 : index
      %726 = vector.load %arg8[%c1_287, %c116_288] : memref<2x512xf32, #tpu.memory_space<vmem>>, vector<1x352xf32>
      %727 = vector.shape_cast %726 : vector<1x352xf32> to vector<352xf32>
      %c90_289 = arith.constant 90 : index
      %728 = memref.load %arg2[%c90_289] : memref<98xf32, #tpu.memory_space<smem>>
      %729 = vector.broadcast %728 : f32 to vector<352xf32>
      %730 = arith.mulf %729, %727 : vector<352xf32>
      %731 = arith.addf %725, %730 : vector<352xf32>
      %c1_290 = arith.constant 1 : index
      %c132_291 = arith.constant 132 : index
      %732 = vector.load %arg8[%c1_290, %c132_291] : memref<2x512xf32, #tpu.memory_space<vmem>>, vector<1x352xf32>
      %733 = vector.shape_cast %732 : vector<1x352xf32> to vector<352xf32>
      %c91_292 = arith.constant 91 : index
      %734 = memref.load %arg2[%c91_292] : memref<98xf32, #tpu.memory_space<smem>>
      %735 = vector.broadcast %734 : f32 to vector<352xf32>
      %736 = arith.mulf %735, %733 : vector<352xf32>
      %737 = arith.addf %731, %736 : vector<352xf32>
      %c1_293 = arith.constant 1 : index
      %c133_294 = arith.constant 133 : index
      %738 = vector.load %arg8[%c1_293, %c133_294] : memref<2x512xf32, #tpu.memory_space<vmem>>, vector<1x352xf32>
      %739 = vector.shape_cast %738 : vector<1x352xf32> to vector<352xf32>
      %c92_295 = arith.constant 92 : index
      %740 = memref.load %arg2[%c92_295] : memref<98xf32, #tpu.memory_space<smem>>
      %741 = vector.broadcast %740 : f32 to vector<352xf32>
      %742 = arith.mulf %741, %739 : vector<352xf32>
      %743 = arith.addf %737, %742 : vector<352xf32>
      %c1_296 = arith.constant 1 : index
      %c134_297 = arith.constant 134 : index
      %744 = vector.load %arg8[%c1_296, %c134_297] : memref<2x512xf32, #tpu.memory_space<vmem>>, vector<1x352xf32>
      %745 = vector.shape_cast %744 : vector<1x352xf32> to vector<352xf32>
      %c93_298 = arith.constant 93 : index
      %746 = memref.load %arg2[%c93_298] : memref<98xf32, #tpu.memory_space<smem>>
      %747 = vector.broadcast %746 : f32 to vector<352xf32>
      %748 = arith.mulf %747, %745 : vector<352xf32>
      %749 = arith.addf %743, %748 : vector<352xf32>
      %c1_299 = arith.constant 1 : index
      %c135_300 = arith.constant 135 : index
      %750 = vector.load %arg8[%c1_299, %c135_300] : memref<2x512xf32, #tpu.memory_space<vmem>>, vector<1x352xf32>
      %751 = vector.shape_cast %750 : vector<1x352xf32> to vector<352xf32>
      %c94_301 = arith.constant 94 : index
      %752 = memref.load %arg2[%c94_301] : memref<98xf32, #tpu.memory_space<smem>>
      %753 = vector.broadcast %752 : f32 to vector<352xf32>
      %754 = arith.mulf %753, %751 : vector<352xf32>
      %755 = arith.addf %749, %754 : vector<352xf32>
      %c1_302 = arith.constant 1 : index
      %c136_303 = arith.constant 136 : index
      %756 = vector.load %arg8[%c1_302, %c136_303] : memref<2x512xf32, #tpu.memory_space<vmem>>, vector<1x352xf32>
      %757 = vector.shape_cast %756 : vector<1x352xf32> to vector<352xf32>
      %c95 = arith.constant 95 : index
      %758 = memref.load %arg2[%c95] : memref<98xf32, #tpu.memory_space<smem>>
      %759 = vector.broadcast %758 : f32 to vector<352xf32>
      %760 = arith.mulf %759, %757 : vector<352xf32>
      %761 = arith.addf %755, %760 : vector<352xf32>
      %c1_304 = arith.constant 1 : index
      %c137_305 = arith.constant 137 : index
      %762 = vector.load %arg8[%c1_304, %c137_305] : memref<2x512xf32, #tpu.memory_space<vmem>>, vector<1x352xf32>
      %763 = vector.shape_cast %762 : vector<1x352xf32> to vector<352xf32>
      %c96_306 = arith.constant 96 : index
      %764 = memref.load %arg2[%c96_306] : memref<98xf32, #tpu.memory_space<smem>>
      %765 = vector.broadcast %764 : f32 to vector<352xf32>
      %766 = arith.mulf %765, %763 : vector<352xf32>
      %767 = arith.addf %761, %766 : vector<352xf32>
      %c1_307 = arith.constant 1 : index
      %c138_308 = arith.constant 138 : index
      %768 = vector.load %arg8[%c1_307, %c138_308] : memref<2x512xf32, #tpu.memory_space<vmem>>, vector<1x352xf32>
      %769 = vector.shape_cast %768 : vector<1x352xf32> to vector<352xf32>
      %c97 = arith.constant 97 : index
      %770 = memref.load %arg2[%c97] : memref<98xf32, #tpu.memory_space<smem>>
      %771 = vector.broadcast %770 : f32 to vector<352xf32>
      %772 = arith.mulf %771, %769 : vector<352xf32>
      %773 = arith.addf %767, %772 : vector<352xf32>
      %774 = arith.negf %773 : vector<352xf32>
      %775 = math.exp %774 : vector<352xf32>
      %cst_309 = arith.constant 1.000000e+00 : f32
      %776 = vector.broadcast %cst_309 : f32 to vector<352xf32>
      %777 = arith.addf %776, %775 : vector<352xf32>
      %778 = arith.divf %776, %777 : vector<352xf32>
      %c0_310 = arith.constant 0 : index
      %c0_311 = arith.constant 0 : index
      %c0_312 = arith.constant 0 : index
      %779 = vector.load %arg5[%c0_310, %c0_311, %c0_312] : memref<1x1x352xf32, #tpu.memory_space<vmem>>, vector<1x1x352xf32>
      %780 = vector.shape_cast %779 : vector<1x1x352xf32> to vector<352xf32>
      %781 = vector.shape_cast %778 : vector<352xf32> to vector<1x1x352xf32>
      tpu.vector_store %arg5[%c0_310, %c0_311, %c0_312], %781 {strides = array<i32>} : memref<1x1x352xf32, #tpu.memory_space<vmem>>, vector<1x1x352xf32>,
    } else {
    }
    return
  }
  func.func @transform_0(%arg0: i32, %arg1: i32) -> i32 {
    %c0_i32 = arith.constant 0 : i32
    %c0_i32_0 = arith.constant 0 : i32
    return %c0_i32 : i32
  }
  func.func @transform_1(%arg0: i32, %arg1: i32) -> i32 {
    %c0_i32 = arith.constant 0 : i32
    %c0_i32_0 = arith.constant 0 : i32
    return %c0_i32 : i32
  }
  func.func @transform_2(%arg0: i32, %arg1: i32) -> (i32, i32, i32) {
    %c0_i32 = arith.constant 0 : i32
    %c0_i32_0 = arith.constant 0 : i32
    return %arg0, %arg1, %c0_i32 : i32, i32, i32
  }
  func.func @transform_3(%arg0: i32, %arg1: i32) -> (i32, i32, i32) {
    %c0_i32 = arith.constant 0 : i32
    %c0_i32_0 = arith.constant 0 : i32
    %c0_i32_1 = arith.constant 0 : i32
    return %arg0, %c0_i32, %c0_i32_0 : i32, i32, i32
  }
}

</mosaic_0001>

<llo_original>
// kernel: tpu_custom_call.1
$region0: #{tpu_custom_call.1}
  #allocation0 [shape = 'u32[]', space=smem, size = 0x4, offset = 0x4, fixed_abs, tag = 'smem constant byte address 0x4 - core index']
  #allocation1 [shape = 'u32[72,128]{1,0:T(1,128)}', space=vmem, size = 0x9000, scoped, tag = 'internal scratch']
  #allocation2 [shape = 'f32[1,256]{1,0:T(1,128)}', space=vmem, size = 0x400, scoped, tag = 'scratch operand']
  #allocation3 [shape = 'f32[1,256]{1,0:T(1,128)}', space=vmem, size = 0x400, scoped, tag = 'scratch operand']
  #allocation4 [shape = 'f32[2,512]{1,0:T(2,128)}', space=vmem, size = 0x1000, scoped, tag = 'scratch operand']
  #allocation5 [shape = 'f32[1]{0:T(128)S(6)}', space=smem, size = 0x200, scoped, tag = 'scoped memory for tpu_custom_call.1']
  %s0 = inlined_call_operand.vmem [shape: f32[98], index: 0, kind: input, shape index: {}]
  %s1 = inlined_call_operand.<no memory space> [shape: f32[1], index: 1, kind: input, shape index: {}]
  %s2 = inlined_call_operand.hbm [shape: f32[2,4,256], index: 2, kind: input, shape index: {}]
  %s3 = inlined_call_operand.hbm [shape: f32[2,1,352], index: 3, kind: output, shape index: {}]
  %s4 = sld [smem:[#allocation0]]
  $region61: #{tpu_custom_call.1} parent=0
    _
  %s6 = ssub.s32 1, %s4
  %s7 = scalar_select 0, %s6, %s4
  %8 = sst [smem:[#allocation5]] %s1
  $region1: #{tpu_custom_call.1} parent=0
    #allocation6 [shape = 'u8[512]{0}', space=smem, size = 0x200, scoped, tag = 'input window, operand 0, single buffered']
    #allocation7 [shape = 's32[2]{0}', space=sflag, size = 0x8, scoped, tag = 'scoped memory for tpu_custom_call.1']
    #allocation8 [shape = 's32[2]{0}', space=sflag, size = 0x8, scoped, tag = 'scoped memory for tpu_custom_call.1']
    #allocation9 [shape = 's32[2]{0}', space=sflag, size = 0x8, scoped, tag = 'scoped memory for tpu_custom_call.1']
    #allocation10 [shape = 'u8[8192]{0}', space=vmem, size = 0x2000, scoped, tag = 'input window, operand 2']
    #allocation11 [shape = 'u8[3072]{0}', space=vmem, size = 0xc00, scoped, tag = 'output window, operand 0']
    %9 = vsyncpa [#allocation9], 0
    %10 = vsyncpa [#allocation7], 0
    %s11 = scalar_lea.sflag [#allocation7], 1
    %12 = vsyncpa %s11, 0
    %13 = vsyncpa [#allocation8], 0
    %s14 = scalar_lea.sflag [#allocation8], 1
    %15 = vsyncpa %s14, 0
    loop: start=0, step=1, limit=4
    $region2: #{tpu_custom_call.1} parent=1 // loop_pre_header
      _
    $region3: #{tpu_custom_call.1} parent=1 // loop_header
      %s17 = sphi 0, %s21
      %p18 = scmp.ge.s32.totalorder %s17, 4
      %s24 = sphi 0, %s36
      %s25 = sphi 0, %s32
      %s26 = sphi 0, %s24
      %s27 = sphi 0, %s25
      %s28 = sphi 0, %s26
      %s29 = sphi 0, %s27
      %s37 = sphi 0, %s37
      %s39 = sphi 0, %s37
      %s40 = sphi 0, %s39
      %s54 = sphi 0, %s40
      %s58 = sphi 0, %s58
      %s60 = sphi 0, %s58
      %s61 = sphi 0, %s60
      %s75 = sphi 0, %s61
      %s83 = sphi 0, %s85
      %s86 = sphi 0, %s83
      %s87 = sphi 0, %s86
      %s103 = sphi 0, %s87
      %s109 = sphi 0, %s111
      %s112 = sphi 0, %s109
      %s113 = sphi 0, %s112
      %s129 = sphi 0, %s113
    $region4: #{tpu_custom_call.1} parent=1 // loop_header_branch
      %20 = sbr.rel (%p18) target = $region8
    $region5: #{tpu_custom_call.1} parent=1 // loop_body
      %s22 = ssub.s32 %s17, 1
      %s23 = ssub.s32 %s17, 2
      %s30 = sadd.s32 1, %s25
      %p31 = scmp.ge.s32.totalorder %s30, 1
      %s32 = scalar_select %p31, 0, %s30
      %s33 = sadd.s32 1, %s24
      %s34 = scalar_select %p31, %s33, %s24
      %p35 = scmp.ge.s32.totalorder %s34, 2
      %s36 = scalar_select %p35, 0, %s34
      %s38 = sadd.s32 %s37, 1
      %p41 = scmp.eq.s32.totalorder %s17, 1
      %p42 = scmp.ne.s32.totalorder %s37, %s39
      %p43 = scmp.eq.s32.totalorder %s17, 0
      %p44 = por %p42, %p43
      %p45 = scmp.ne.s32.totalorder %s37, %s39
      %p46 = scmp.eq.s32.totalorder %s22, 1
      %p47 = por %p45, %p46
      %p48 = scmp.ne.s32.totalorder %s39, %s40
      %p49 = scmp.eq.s32.totalorder %s22, 0
      %p50 = por %p48, %p49
      %p51 = scmp.ne.s32.totalorder %s39, %s40
      %p52 = scmp.eq.s32.totalorder %s23, 1
      %p53 = por %p51, %p52
      %p55 = scmp.ne.s32.totalorder %s40, %s54
      %p56 = scmp.eq.s32.totalorder %s23, 0
      %p57 = por %p55, %p56
      %s59 = sadd.s32 %s58, 1
      %p62 = scmp.eq.s32.totalorder %s17, 1
      %p63 = scmp.ne.s32.totalorder %s58, %s60
      %p64 = scmp.eq.s32.totalorder %s17, 0
      %p65 = por %p63, %p64
      %p66 = scmp.ne.s32.totalorder %s58, %s60
      %p67 = scmp.eq.s32.totalorder %s22, 1
      %p68 = por %p66, %p67
      %p69 = scmp.ne.s32.totalorder %s60, %s61
      %p70 = scmp.eq.s32.totalorder %s22, 0
      %p71 = por %p69, %p70
      %p72 = scmp.ne.s32.totalorder %s60, %s61
      %p73 = scmp.eq.s32.totalorder %s23, 1
      %p74 = por %p72, %p73
      %p76 = scmp.ne.s32.totalorder %s61, %s75
      %p77 = scmp.eq.s32.totalorder %s23, 0
      %p78 = por %p76, %p77
      %s79 = ssub.s32 %s24, %s36
      %s80 = ssub.s32 %s25, %s32
      %s81 = sor.u32 %s79, %s80
      %p82 = scmp.eq.s32.totalorder %s81, 0
      %s84 = sadd.s32 %s83, 1
      %s85 = scalar_select %p82, %s83, %s84
      %p88 = pneg %p82
      %p89 = scmp.eq.s32.totalorder %s17, 1
      %p90 = por %p88, %p89
      %p91 = scmp.ne.s32.totalorder %s83, %s86
      %p92 = scmp.eq.s32.totalorder %s17, 0
      %p93 = por %p91, %p92
      %p94 = scmp.ne.s32.totalorder %s83, %s86
      %p95 = scmp.eq.s32.totalorder %s22, 1
      %p96 = por %p94, %p95
      %p97 = scmp.ne.s32.totalorder %s86, %s87
      %p98 = scmp.eq.s32.totalorder %s22, 0
      %p99 = por %p97, %p98
      %p100 = scmp.ne.s32.totalorder %s86, %s87
      %p101 = scmp.eq.s32.totalorder %s23, 1
      %p102 = por %p100, %p101
      %p104 = scmp.ne.s32.totalorder %s87, %s103
      %p105 = scmp.eq.s32.totalorder %s23, 0
      %p106 = por %p104, %p105
      %s107 = ssub.s32 %s24, %s36
      %p108 = scmp.eq.s32.totalorder %s107, 0
      %s110 = sadd.s32 %s109, 1
      %s111 = scalar_select %p108, %s109, %s110
      %p114 = pneg %p108
      %p115 = scmp.eq.s32.totalorder %s17, 1
      %p116 = por %p114, %p115
      %p117 = scmp.ne.s32.totalorder %s109, %s112
      %p118 = scmp.eq.s32.totalorder %s17, 0
      %p119 = por %p117, %p118
      %p120 = scmp.ne.s32.totalorder %s109, %s112
      %p121 = scmp.eq.s32.totalorder %s22, 1
      %p122 = por %p120, %p121
      %p123 = scmp.ne.s32.totalorder %s112, %s113
      %p124 = scmp.eq.s32.totalorder %s22, 0
      %p125 = por %p123, %p124
      %p126 = scmp.ne.s32.totalorder %s112, %s113
      %p127 = scmp.eq.s32.totalorder %s23, 1
      %p128 = por %p126, %p127
      %p130 = scmp.ne.s32.totalorder %s113, %s129
      %p131 = scmp.eq.s32.totalorder %s23, 0
      %p132 = por %p130, %p131
      %p133 = scmp.le.s32.totalorder 1, %s17
      %p134 = scmp.lt.s32.totalorder %s17, 3
      %p135 = pnand %p133, %p134
      %p136 = pneg %p135
      // Predicated region
      $region9: #{tpu_custom_call.1} parent=5 // pred_check
        _
      $region10: #{tpu_custom_call.1} parent=5 // pred_check_branch
        %138 = sbr.rel (%p135) target = $region12
      $region11: #{tpu_custom_call.1} parent=5 // pred_region
        %s139 = ssub.s32 %s17, 1
        // Predicated region
        $region13: #{tpu_custom_call.1} parent=11 // pred_check
          %p140 = pneg %p50
        $region14: #{tpu_custom_call.1} parent=11 // pred_check_branch
          %142 = sbr.rel (%p140) target = $region16
        $region15: #{tpu_custom_call.1} parent=11 // pred_region
          %144 = vsyncadd [#allocation9], 0
          %s146 = sshll.u32 %s0, 4
          %s147 = int_to_ptr.vmem [resolvable:$true] %s146
          %149 = dma.vmem_to_smem %s147, 16, [#allocation6], [#allocation9]
        $region16: #{tpu_custom_call.1} parent=11 // pred_fallthru
          _
        // Predicated region
        $region17: #{tpu_custom_call.1} parent=11 // pred_check
          %p150 = pneg %p71
        $region18: #{tpu_custom_call.1} parent=11 // pred_check_branch
          %152 = sbr.rel (%p150) target = $region20
        $region19: #{tpu_custom_call.1} parent=11 // pred_region
          _
        $region20: #{tpu_custom_call.1} parent=11 // pred_fallthru
          _
      $region12: #{tpu_custom_call.1} parent=5 // pred_fallthru
        _
      %p153 = scmp.lt.s32.totalorder %s17, 2
      // Predicated region
      $region21: #{tpu_custom_call.1} parent=5 // pred_check
        %p154 = pneg %p153
      $region22: #{tpu_custom_call.1} parent=5 // pred_check_branch
        %156 = sbr.rel (%p154) target = $region24
      $region23: #{tpu_custom_call.1} parent=5 // pred_region
        // Predicated region
        $region25: #{tpu_custom_call.1} parent=23 // pred_check
          %p157 = pneg %p93
        $region26: #{tpu_custom_call.1} parent=23 // pred_check_branch
          %159 = sbr.rel (%p157) target = $region28
        $region27: #{tpu_custom_call.1} parent=23 // pred_region
          %s160 = sand.u32 %s83, 1
          %s161 = scalar_lea.sflag [#allocation7], %s160
          %s162 = sand.u32 %s83, 1
          %s163 = smul.addr %s162, 8
          %s164 = scalar_lea.vmem [#allocation10], %s163
          %166 = vsyncadd %s161, 0
          %s167 = smul.addr %s25, 2
          %s168 = smul.addr %s24, 2
          %s169 = sadd.s32 %s167, %s168
          %s170 = smul.addr %s169, 4
          %s171 = scalar_lea.hbm %s2, %s170
          %s173 = sshll.u32 %s171, 4
          %s174 = int_to_ptr.hbm [resolvable:$true] %s173
          %s175 = sshll.u32 %s164, 4
          %s176 = int_to_ptr.vmem [resolvable:$true] %s175
          %178 = dma.hbm_to_vmem [thread:$0]  %s174, 128, %s176, %s161
        $region28: #{tpu_custom_call.1} parent=23 // pred_fallthru
          _
      $region24: #{tpu_custom_call.1} parent=5 // pred_fallthru
        _
      %p179 = scmp.le.s32.totalorder 1, %s17
      %p180 = scmp.lt.s32.totalorder %s17, 3
      %p181 = pnand %p179, %p180
      %p182 = pneg %p181
      // Predicated region
      $region29: #{tpu_custom_call.1} parent=5 // pred_check
        _
      $region30: #{tpu_custom_call.1} parent=5 // pred_check_branch
        %184 = sbr.rel (%p181) target = $region32
      $region31: #{tpu_custom_call.1} parent=5 // pred_region
        %s185 = ssub.s32 %s17, 1
        // Predicated region
        $region33: #{tpu_custom_call.1} parent=31 // pred_check
          %p186 = pneg %p50
        $region34: #{tpu_custom_call.1} parent=31 // pred_check_branch
          %188 = sbr.rel (%p186) target = $region36
        $region35: #{tpu_custom_call.1} parent=31 // pred_region
          %190 = dma.done [#allocation9], 16
        $region36: #{tpu_custom_call.1} parent=31 // pred_fallthru
          _
        %s191 = sand.u32 %s86, 1
        %s192 = scalar_lea.sflag [#allocation7], %s191
        %s193 = sand.u32 %s86, 1
        %s194 = smul.addr %s193, 8
        %s195 = scalar_lea.vmem [#allocation10], %s194
        // Predicated region
        $region37: #{tpu_custom_call.1} parent=31 // pred_check
          %p196 = pneg %p99
        $region38: #{tpu_custom_call.1} parent=31 // pred_check_branch
          %198 = sbr.rel (%p196) target = $region40
        $region39: #{tpu_custom_call.1} parent=31 // pred_region
          %200 = dma.done %s192, 128
        $region40: #{tpu_custom_call.1} parent=31 // pred_fallthru
          _
        %201 = sfence
        %p202 = pneg %p50
        %p203 = pneg %p47
        %p204 = pneg %p71
        %p205 = pneg %p68
        %s206 = sand.u32 %s86, 1
        %s207 = scalar_lea.sflag [#allocation7], %s206
        %s208 = sand.u32 %s86, 1
        %s209 = smul.addr %s208, 8
        %s210 = scalar_lea.vmem [#allocation10], %s209
        %p211 = pneg %p99
        %p212 = pneg %p96
        %p213 = pneg %p125
        %p214 = pneg %p122
        %s215 = sand.u32 %s112, 1
        %s216 = scalar_lea.sflag [#allocation8], %s215
        %s217 = sand.u32 %s112, 1
        %s218 = smul.addr %s217, 3
        %s219 = scalar_lea.vmem [#allocation11], %s218
        %p220 = scmp.eq.s32.totalorder %s27, 0
        // Predicated region
        $region41: #{tpu_custom_call.1} parent=31 // pred_check
          %p221 = pneg %p220
        $region42: #{tpu_custom_call.1} parent=31 // pred_check_branch
          %223 = sbr.rel (%p221) target = $region44
        $region43: #{tpu_custom_call.1} parent=31 // pred_region
          %v224 = vlaneseq
          %vm225 = vcmp.ge.s32.totalorder %v224, 0
          %vm226 = vcmp.lt.s32.totalorder %v224, 256
          %vm227 = vmand %vm225, %vm226
          %228 = vst.msk [vmem:[#allocation2] sm:$0x3] %vm227, -inf
          %229 = vst.msk [vmem:[#allocation3] sm:$0x3] %vm227, 0.0
        $region44: #{tpu_custom_call.1} parent=31 // pred_fallthru
          _
        %v230 = vld [vmem:[%s195] sm:$0xff]
        %v231 = vld [vmem:[#allocation2] sm:$0x3]
        %233 = vst [vmem:[#allocation1] ss:$2 sm:$0xff] %v230
        %v234 = vld.sshfl [vmem:[#allocation1] sm:$0xff pattern:$0x75316420]
        %v235 = vld.sshfl [vmem:[#allocation1 + $0x8] sm:$0xff pattern:$0x75316420]
        %vm238 = vcmask 1043456
        %v239 = vsel %vm238, %v234, -inf
        %v240 = vrot.slane %v239, 4
        %v241 = vmax.f32 %v239, %v240
        %v242 = vrot.slane %v241, 2
        %v243 = vmax.f32 %v241, %v242
        %v244 = vrot.slane %v243, 1
        %v245 = vmax.f32 %v243, %v244
        %v246 = vsel %vm238, %v235, -inf
        %v247 = vrot.slane %v246, 4
        %v248 = vmax.f32 %v246, %v247
        %v249 = vrot.slane %v248, 2
        %v250 = vmax.f32 %v248, %v249
        %v251 = vrot.slane %v250, 1
        %v252 = vmax.f32 %v250, %v251
        %v255 = vrot.slane %v252, 7
        %vm256 = vcmask 1040384
        %v257 = vsel %vm256, %v245, %v255
        %v259 = vmax.f32 %v231, %v257
        %v260 = vlaneseq
        %vm261 = vcmp.ge.s32.totalorder %v260, 0
        %vm262 = vcmp.lt.s32.totalorder %v260, 256
        %vm263 = vmand %vm261, %vm262
        %264 = vst.msk [vmem:[#allocation2] sm:$0x3] %vm263, %v259
        %v265 = vld [vmem:[#allocation3] sm:$0x3]
        %266 = vst [vmem:[#allocation1] ss:$2 sm:$0xff] %v230
        %v267 = vld.sshfl [vmem:[#allocation1] sm:$0xff pattern:$0x75316420]
        %v268 = vld.sshfl [vmem:[#allocation1 + $0x8] sm:$0xff pattern:$0x75316420]
        %v271 = vsel %vm238, %v267, 0.0
        %v272 = vrot.slane %v271, 4
        %v273 = vadd.f32 %v271, %v272
        %v274 = vrot.slane %v273, 2
        %v275 = vadd.f32 %v273, %v274
        %v276 = vrot.slane %v275, 1
        %v277 = vadd.f32 %v275, %v276
        %v278 = vsel %vm238, %v268, 0.0
        %v279 = vrot.slane %v278, 4
        %v280 = vadd.f32 %v278, %v279
        %v281 = vrot.slane %v280, 2
        %v282 = vadd.f32 %v280, %v281
        %v283 = vrot.slane %v282, 1
        %v284 = vadd.f32 %v282, %v283
        %v287 = vrot.slane %v284, 7
        %v288 = vsel %vm256, %v277, %v287
        %v290 = vadd.f32 %v265, %v288
        %291 = vst.msk [vmem:[#allocation3] sm:$0x3] %vm263, %v290
        // Predicated region
        $region45: #{tpu_custom_call.1} parent=31 // pred_check
          %p292 = pneg %p220
        $region46: #{tpu_custom_call.1} parent=31 // pred_check_branch
          %294 = sbr.rel (%p292) target = $region48
        $region47: #{tpu_custom_call.1} parent=31 // pred_region
          %295 = vst [vmem:[#allocation4] sm:$0xff] 0.0
          %v296 = vld [vmem:[#allocation2] sm:$0x1]
          %v299 = vunpack.c.l.s4 857870592
          %v300 = vunpack.c.0.s8 %v299
          %v301 = vperm.slane %v296, %v300
          %302 = vrot.lane.b32.xlu0 %v301, 69
          %v303 = vpop.permute.xlu0 %302
          %vm305 = vcmask 688680
          %306 = vst.msk [vmem:[#allocation4] sm:$0x1] %vm305, %v303
          %v307 = vld [vmem:[#allocation3] sm:$0x1]
          %v310 = vunpack.c.l.s4 857870592
          %v311 = vunpack.c.0.s8 %v310
          %v312 = vperm.slane %v307, %v311
          %313 = vrot.lane.b32.xlu0 %v312, 69
          %v314 = vpop.permute.xlu0 %313
          %316 = vst.msk [vmem:[#allocation4 + $0x1] sm:$0x1] %vm305, %v314
          %v317 = vld [vmem:[#allocation2] sm:$0x1]
          %v320 = vunpack.c.l.s4 857870592
          %v321 = vunpack.c.0.s8 %v320
          %v322 = vperm.slane %v317, %v321
          %323 = vrot.lane.b32.xlu0 %v322, 75
          %v324 = vpop.permute.xlu0 %323
          %vm326 = vcmask 869080
          %327 = vst.msk [vmem:[#allocation4] sm:$0x1] %vm326, %v324
          %v328 = vld [vmem:[#allocation3] sm:$0x1]
          %v331 = vunpack.c.l.s4 857870592
          %v332 = vunpack.c.0.s8 %v331
          %v333 = vperm.slane %v328, %v332
          %334 = vrot.lane.b32.xlu0 %v333, 75
          %v335 = vpop.permute.xlu0 %334
          %337 = vst.msk [vmem:[#allocation4 + $0x1] sm:$0x1] %vm326, %v335
          %v338 = vld [vmem:[#allocation2] sm:$0x1]
          %v341 = vunpack.c.l.s4 857870592
          %v342 = vunpack.c.0.s8 %v341
          %v343 = vperm.slane %v338, %v342
          %344 = vrot.lane.b32.xlu0 %v343, 81
          %v345 = vpop.permute.xlu0 %344
          %v346 = vrot.slane %v345, 6
          %vm347 = vcmask 662528
          %v348 = vsel %vm347, %v346, %v345
          %vm350 = vcmask 1041288
          %vm351 = vcmask 2050
          %vm352 = vmor %vm351, %vm350
          %353 = vst.msk [vmem:[#allocation4] sm:$0x5] %vm352, %v348
          %v354 = vld [vmem:[#allocation3] sm:$0x1]
          %v357 = vunpack.c.l.s4 857870592
          %v358 = vunpack.c.0.s8 %v357
          %v359 = vperm.slane %v354, %v358
          %360 = vrot.lane.b32.xlu0 %v359, 81
          %v361 = vpop.permute.xlu0 %360
          %v362 = vrot.slane %v361, 6
          %v363 = vsel %vm347, %v362, %v361
          %365 = vst.msk [vmem:[#allocation4 + $0x1] sm:$0x5] %vm352, %v363
          %v366 = vld [vmem:[#allocation2] sm:$0x1]
          %v369 = vunpack.c.l.s4 857870592
          %v370 = vunpack.c.0.s8 %v369
          %v371 = vperm.slane %v366, %v370
          %372 = vrot.lane.b32.xlu0 %v371, 87
          %v373 = vpop.permute.xlu0 %372
          %vm375 = vcmask 180280
          %376 = vst.msk [vmem:[#allocation4 + $0x2] sm:$0x1] %vm375, %v373
          %v377 = vld [vmem:[#allocation3] sm:$0x1]
          %v380 = vunpack.c.l.s4 857870592
          %v381 = vunpack.c.0.s8 %v380
          %v382 = vperm.slane %v377, %v381
          %383 = vrot.lane.b32.xlu0 %v382, 87
          %v384 = vpop.permute.xlu0 %383
          %386 = vst.msk [vmem:[#allocation4 + $0x3] sm:$0x1] %vm375, %v384
          %v387 = vld [vmem:[#allocation2] sm:$0x1]
          %v390 = vunpack.c.l.s4 857870592
          %v391 = vunpack.c.0.s8 %v390
          %v392 = vperm.slane %v387, %v391
          %393 = vrot.lane.b32.xlu0 %v392, 93
          %v394 = vpop.permute.xlu0 %393
          %vm396 = vcmask 360680
          %397 = vst.msk [vmem:[#allocation4 + $0x2] sm:$0x1] %vm396, %v394
          %v398 = vld [vmem:[#allocation3] sm:$0x1]
          %v401 = vunpack.c.l.s4 857870592
          %v402 = vunpack.c.0.s8 %v401
          %v403 = vperm.slane %v398, %v402
          %404 = vrot.lane.b32.xlu0 %v403, 93
          %v405 = vpop.permute.xlu0 %404
          %407 = vst.msk [vmem:[#allocation4 + $0x3] sm:$0x1] %vm396, %v405
          %v408 = vld [vmem:[#allocation2] sm:$0x1]
          %v411 = vunpack.c.l.s4 857870592
          %v412 = vunpack.c.0.s8 %v411
          %v413 = vperm.slane %v408, %v412
          %414 = vrot.lane.b32.xlu0 %v413, 99
          %v415 = vpop.permute.xlu0 %414
          %vm417 = vcmask 541080
          %418 = vst.msk [vmem:[#allocation4 + $0x2] sm:$0x1] %vm417, %v415
          %v419 = vld [vmem:[#allocation3] sm:$0x1]
          %v422 = vunpack.c.l.s4 857870592
          %v423 = vunpack.c.0.s8 %v422
          %v424 = vperm.slane %v419, %v423
          %425 = vrot.lane.b32.xlu0 %v424, 99
          %v426 = vpop.permute.xlu0 %425
          %428 = vst.msk [vmem:[#allocation4 + $0x3] sm:$0x1] %vm417, %v426
          %v429 = vld [vmem:[#allocation2] sm:$0x1]
          %v432 = vunpack.c.l.s4 857870592
          %v433 = vunpack.c.0.s8 %v432
          %v434 = vperm.slane %v429, %v433
          %435 = vrot.lane.b32.xlu0 %v434, 105
          %v436 = vpop.permute.xlu0 %435
          %vm438 = vcmask 721480
          %439 = vst.msk [vmem:[#allocation4 + $0x2] sm:$0x1] %vm438, %v436
          %v440 = vld [vmem:[#allocation3] sm:$0x1]
          %v443 = vunpack.c.l.s4 857870592
          %v444 = vunpack.c.0.s8 %v443
          %v445 = vperm.slane %v440, %v444
          %446 = vrot.lane.b32.xlu0 %v445, 105
          %v447 = vpop.permute.xlu0 %446
          %449 = vst.msk [vmem:[#allocation4 + $0x3] sm:$0x1] %vm438, %v447
          %v450 = vld [vmem:[#allocation2] sm:$0x1]
          %v453 = vunpack.c.l.s4 857870592
          %v454 = vunpack.c.0.s8 %v453
          %v455 = vperm.slane %v450, %v454
          %456 = vrot.lane.b32.xlu0 %v455, 111
          %v457 = vpop.permute.xlu0 %456
          %vm459 = vcmask 901880
          %460 = vst.msk [vmem:[#allocation4 + $0x2] sm:$0x1] %vm459, %v457
          %v461 = vld [vmem:[#allocation3] sm:$0x1]
          %v464 = vunpack.c.l.s4 857870592
          %v465 = vunpack.c.0.s8 %v464
          %v466 = vperm.slane %v461, %v465
          %467 = vrot.lane.b32.xlu0 %v466, 111
          %v468 = vpop.permute.xlu0 %467
          %470 = vst.msk [vmem:[#allocation4 + $0x3] sm:$0x1] %vm459, %v468
          %v471 = vld [vmem:[#allocation2 + $0x1] sm:$0x1]
          %v474 = vunpack.c.l.s4 857870592
          %v475 = vunpack.c.0.s8 %v474
          %v476 = vperm.slane %v471, %v475
          %477 = vrot.lane.b32.xlu0 %v476, 117
          %v478 = vpop.permute.xlu0 %477
          %v479 = vrot.slane %v478, 6
          %vm480 = vcmask 957440
          %v481 = vsel %vm480, %v479, %v478
          %vm483 = vcmask 1041320
          %vm484 = vcmask 34818
          %vm485 = vmor %vm484, %vm483
          %486 = vst.msk [vmem:[#allocation4 + $0x2] sm:$0x5] %vm485, %v481
          %v487 = vld [vmem:[#allocation3 + $0x1] sm:$0x1]
          %v490 = vunpack.c.l.s4 857870592
          %v491 = vunpack.c.0.s8 %v490
          %v492 = vperm.slane %v487, %v491
          %493 = vrot.lane.b32.xlu0 %v492, 117
          %v494 = vpop.permute.xlu0 %493
          %v495 = vrot.slane %v494, 6
          %v496 = vsel %vm480, %v495, %v494
          %498 = vst.msk [vmem:[#allocation4 + $0x3] sm:$0x5] %vm485, %v496
          %v499 = vld [vmem:[#allocation2 + $0x1] sm:$0x1]
          %v502 = vunpack.c.l.s4 857870592
          %v503 = vunpack.c.0.s8 %v502
          %v504 = vperm.slane %v499, %v503
          %505 = vrot.lane.b32.xlu0 %v504, 123
          %v506 = vpop.permute.xlu0 %505
          %vm508 = vcmask 213080
          %509 = vst.msk [vmem:[#allocation4 + $0x4] sm:$0x1] %vm508, %v506
          %v510 = vld [vmem:[#allocation3 + $0x1] sm:$0x1]
          %v513 = vunpack.c.l.s4 857870592
          %v514 = vunpack.c.0.s8 %v513
          %v515 = vperm.slane %v510, %v514
          %516 = vrot.lane.b32.xlu0 %v515, 123
          %v517 = vpop.permute.xlu0 %516
          %519 = vst.msk [vmem:[#allocation4 + $0x5] sm:$0x1] %vm508, %v517
          %v520 = vld [vmem:[#allocation2 + $0x1] sm:$0x1]
          %v523 = vunpack.c.l.s4 857870592
          %v524 = vunpack.c.0.s8 %v523
          %v525 = vperm.slane %v520, %v524
          %526 = vrot.lane.b32.xlu0 %v525, 1
          %v527 = vpop.permute.xlu0 %526
          %vm529 = vcmask 393480
          %530 = vst.msk [vmem:[#allocation4 + $0x4] sm:$0x1] %vm529, %v527
          %v531 = vld [vmem:[#allocation3 + $0x1] sm:$0x1]
          %v534 = vunpack.c.l.s4 857870592
          %v535 = vunpack.c.0.s8 %v534
          %v536 = vperm.slane %v531, %v535
          %537 = vrot.lane.b32.xlu0 %v536, 1
          %v538 = vpop.permute.xlu0 %537
          %540 = vst.msk [vmem:[#allocation4 + $0x5] sm:$0x1] %vm529, %v538
          %v541 = vld [vmem:[#allocation2 + $0x1] sm:$0x1]
          %v544 = vunpack.c.l.s4 857870592
          %v545 = vunpack.c.0.s8 %v544
          %v546 = vperm.slane %v541, %v545
          %547 = vrot.lane.b32.xlu0 %v546, 7
          %v548 = vpop.permute.xlu0 %547
          %vm550 = vcmask 573880
          %551 = vst.msk [vmem:[#allocation4 + $0x4] sm:$0x1] %vm550, %v548
          %v552 = vld [vmem:[#allocation3 + $0x1] sm:$0x1]
          %v555 = vunpack.c.l.s4 857870592
          %v556 = vunpack.c.0.s8 %v555
          %v557 = vperm.slane %v552, %v556
          %558 = vrot.lane.b32.xlu0 %v557, 7
          %v559 = vpop.permute.xlu0 %558
          %561 = vst.msk [vmem:[#allocation4 + $0x5] sm:$0x1] %vm550, %v559
          %v562 = vld [vmem:[#allocation2 + $0x1] sm:$0x1]
          %v565 = vunpack.c.l.s4 857870592
          %v566 = vunpack.c.0.s8 %v565
          %v567 = vperm.slane %v562, %v566
          %568 = vrot.lane.b32.xlu0 %v567, 13
          %v569 = vpop.permute.xlu0 %568
          %vm571 = vcmask 754280
          %572 = vst.msk [vmem:[#allocation4 + $0x4] sm:$0x1] %vm571, %v569
          %v573 = vld [vmem:[#allocation3 + $0x1] sm:$0x1]
          %v576 = vunpack.c.l.s4 857870592
          %v577 = vunpack.c.0.s8 %v576
          %v578 = vperm.slane %v573, %v577
          %579 = vrot.lane.b32.xlu0 %v578, 13
          %v580 = vpop.permute.xlu0 %579
          %582 = vst.msk [vmem:[#allocation4 + $0x5] sm:$0x1] %vm571, %v580
          %v583 = vld [vmem:[#allocation2 + $0x1] sm:$0x1]
          %v586 = vunpack.c.l.s4 857870592
          %v587 = vunpack.c.0.s8 %v586
          %v588 = vperm.slane %v583, %v587
          %589 = vrot.lane.b32.xlu0 %v588, 19
          %v590 = vpop.permute.xlu0 %589
          %vm592 = vcmask 934680
          %593 = vst.msk [vmem:[#allocation4 + $0x4] sm:$0x1] %vm592, %v590
          %v594 = vld [vmem:[#allocation3 + $0x1] sm:$0x1]
          %v597 = vunpack.c.l.s4 857870592
          %v598 = vunpack.c.0.s8 %v597
          %v599 = vperm.slane %v594, %v598
          %600 = vrot.lane.b32.xlu0 %v599, 19
          %v601 = vpop.permute.xlu0 %600
          %603 = vst.msk [vmem:[#allocation4 + $0x5] sm:$0x1] %vm592, %v601
          %v604 = vld [vmem:[#allocation2 + $0x1] sm:$0x1]
          %v607 = vunpack.c.l.s4 857870592
          %v608 = vunpack.c.0.s8 %v607
          %v609 = vperm.slane %v604, %v608
          %610 = vrot.lane.b32.xlu0 %v609, 25
          %v611 = vpop.permute.xlu0 %610
          %v612 = vrot.slane %v611, 6
          %vm613 = vcmask 203776
          %v614 = vsel %vm613, %v612, %v611
          %vm616 = vcmask 1041352
          %vm617 = vcmask 67586
          %vm618 = vmor %vm617, %vm616
          %619 = vst.msk [vmem:[#allocation4 + $0x4] sm:$0x5] %vm618, %v614
          %v620 = vld [vmem:[#allocation3 + $0x1] sm:$0x1]
          %v623 = vunpack.c.l.s4 857870592
          %v624 = vunpack.c.0.s8 %v623
          %v625 = vperm.slane %v620, %v624
          %626 = vrot.lane.b32.xlu0 %v625, 25
          %v627 = vpop.permute.xlu0 %626
          %v628 = vrot.slane %v627, 6
          %v629 = vsel %vm613, %v628, %v627
          %631 = vst.msk [vmem:[#allocation4 + $0x5] sm:$0x5] %vm618, %v629
          %v632 = vld [vmem:[#allocation2 + $0x1] sm:$0x1]
          %v635 = vunpack.c.l.s4 857870592
          %v636 = vunpack.c.0.s8 %v635
          %v637 = vperm.slane %v632, %v636
          %638 = vrot.lane.b32.xlu0 %v637, 31
          %v639 = vpop.permute.xlu0 %638
          %vm641 = vcmask 245880
          %642 = vst.msk [vmem:[#allocation4 + $0x6] sm:$0x1] %vm641, %v639
          %v643 = vld [vmem:[#allocation3 + $0x1] sm:$0x1]
          %v646 = vunpack.c.l.s4 857870592
          %v647 = vunpack.c.0.s8 %v646
          %v648 = vperm.slane %v643, %v647
          %649 = vrot.lane.b32.xlu0 %v648, 31
          %v650 = vpop.permute.xlu0 %649
          %652 = vst.msk [vmem:[#allocation4 + $0x7] sm:$0x1] %vm641, %v650
          %s653 = sld [smem:[#allocation5]]
          %v654 = vstv %s653
          %v655 = vld [vmem:[#allocation4] ss:$2 sm:$0x7]
          %s656 = sld [smem:[#allocation6]]
          %v657 = vstv %s656
          %v658 = vmul.f32 %v657, %v655
          %v659 = vadd.f32 %v654, %v658
          %s660 = sld [smem:[#allocation6 + $0x1]]
          %v661 = vstv %s660
          %v662 = vmul.f32 %v661, %v655
          %664 = vrot.lane.b32.xlu0 %v662, 127
          %v665 = vpop.permute.xlu0 %664
          %v666 = vrot.slane %v665, 1
          %vm667 = vcmask 1039360
          %v668 = vsel %vm667, %v665, %v666
          %v670 = vadd.f32 %v659, %v668
          %s671 = sld [smem:[#allocation6 + $0x2]]
          %v672 = vstv %s671
          %v673 = vmul.f32 %v672, %v655
          %675 = vrot.lane.b32.xlu0 %v673, 126
          %v676 = vpop.permute.xlu0 %675
          %v677 = vrot.slane %v676, 1
          %vm678 = vcmask 1031168
          %v679 = vsel %vm678, %v676, %v677
          %v681 = vadd.f32 %v670, %v679
          %s682 = sld [smem:[#allocation6 + $0x3]]
          %v683 = vstv %s682
          %v684 = vmul.f32 %v683, %v655
          %686 = vrot.lane.b32.xlu0 %v684, 125
          %v687 = vpop.permute.xlu0 %686
          %v688 = vrot.slane %v687, 1
          %vm689 = vcmask 1022976
          %v690 = vsel %vm689, %v687, %v688
          %v692 = vadd.f32 %v681, %v690
          %s693 = sld [smem:[#allocation6 + $0x4]]
          %v694 = vstv %s693
          %v695 = vmul.f32 %v694, %v655
          %697 = vrot.lane.b32.xlu0 %v695, 124
          %v698 = vpop.permute.xlu0 %697
          %v699 = vrot.slane %v698, 1
          %vm700 = vcmask 1014784
          %v701 = vsel %vm700, %v698, %v699
          %v703 = vadd.f32 %v692, %v701
          %s704 = sld [smem:[#allocation6 + $0x5]]
          %v705 = vstv %s704
          %v706 = vmul.f32 %v705, %v655
          %708 = vrot.lane.b32.xlu0 %v706, 123
          %v709 = vpop.permute.xlu0 %708
          %v710 = vrot.slane %v709, 1
          %vm711 = vcmask 1006592
          %v712 = vsel %vm711, %v709, %v710
          %v714 = vadd.f32 %v703, %v712
          %s715 = sld [smem:[#allocation6 + $0x6]]
          %v716 = vstv %s715
          %v717 = vmul.f32 %v716, %v655
          %719 = vrot.lane.b32.xlu0 %v717, 122
          %v720 = vpop.permute.xlu0 %719
          %v721 = vrot.slane %v720, 1
          %vm722 = vcmask 998400
          %v723 = vsel %vm722, %v720, %v721
          %v725 = vadd.f32 %v714, %v723
          %s726 = sld [smem:[#allocation6 + $0x7]]
          %v727 = vstv %s726
          %v728 = vmul.f32 %v727, %v655
          %730 = vrot.lane.b32.xlu0 %v728, 106
          %v731 = vpop.permute.xlu0 %730
          %v732 = vrot.slane %v731, 1
          %vm733 = vcmask 867328
          %v734 = vsel %vm733, %v731, %v732
          %v736 = vadd.f32 %v725, %v734
          %s737 = sld [smem:[#allocation6 + $0x8]]
          %v738 = vstv %s737
          %v739 = vmul.f32 %v738, %v655
          %741 = vrot.lane.b32.xlu0 %v739, 105
          %v742 = vpop.permute.xlu0 %741
          %v743 = vrot.slane %v742, 1
          %vm744 = vcmask 859136
          %v745 = vsel %vm744, %v742, %v743
          %v747 = vadd.f32 %v736, %v745
          %s748 = sld [smem:[#allocation6 + $0x9]]
          %v749 = vstv %s748
          %v750 = vmul.f32 %v749, %v655
          %752 = vrot.lane.b32.xlu0 %v750, 104
          %v753 = vpop.permute.xlu0 %752
          %v754 = vrot.slane %v753, 1
          %vm755 = vcmask 850944
          %v756 = vsel %vm755, %v753, %v754
          %v758 = vadd.f32 %v747, %v756
          %s759 = sld [smem:[#allocation6 + $0xa]]
          %v760 = vstv %s759
          %v761 = vmul.f32 %v760, %v655
          %763 = vrot.lane.b32.xlu0 %v761, 103
          %v764 = vpop.permute.xlu0 %763
          %v765 = vrot.slane %v764, 1
          %vm766 = vcmask 842752
          %v767 = vsel %vm766, %v764, %v765
          %v769 = vadd.f32 %v758, %v767
          %s770 = sld [smem:[#allocation6 + $0xb]]
          %v771 = vstv %s770
          %v772 = vmul.f32 %v771, %v655
          %774 = vrot.lane.b32.xlu0 %v772, 102
          %v775 = vpop.permute.xlu0 %774
          %v776 = vrot.slane %v775, 1
          %vm777 = vcmask 834560
          %v778 = vsel %vm777, %v775, %v776
          %v780 = vadd.f32 %v769, %v778
          %s781 = sld [smem:[#allocation6 + $0xc]]
          %v782 = vstv %s781
          %v783 = vmul.f32 %v782, %v655
          %785 = vrot.lane.b32.xlu0 %v783, 101
          %v786 = vpop.permute.xlu0 %785
          %v787 = vrot.slane %v786, 1
          %vm788 = vcmask 826368
          %v789 = vsel %vm788, %v786, %v787
          %v791 = vadd.f32 %v780, %v789
          %s792 = sld [smem:[#allocation6 + $0xd]]
          %v793 = vstv %s792
          %v794 = vmul.f32 %v793, %v655
          %796 = vrot.lane.b32.xlu0 %v794, 100
          %v797 = vpop.permute.xlu0 %796
          %v798 = vrot.slane %v797, 1
          %vm799 = vcmask 818176
          %v800 = vsel %vm799, %v797, %v798
          %v802 = vadd.f32 %v791, %v800
          %v803 = vld [vmem:[#allocation4] ss:$2 sm:$0xf]
          %s804 = sld [smem:[#allocation6 + $0xe]]
          %v805 = vstv %s804
          %v806 = vmul.f32 %v805, %v803
          %808 = vrot.lane.b32.xlu0 %v806, 84
          %v809 = vpop.permute.xlu0 %808
          %v810 = vrot.slane %v809, 1
          %vm811 = vcmask 687104
          %v812 = vsel %vm811, %v809, %v810
          %v814 = vadd.f32 %v802, %v812
          %s815 = sld [smem:[#allocation6 + $0xf]]
          %v816 = vstv %s815
          %v817 = vmul.f32 %v816, %v803
          %819 = vrot.lane.b32.xlu0 %v817, 83
          %v820 = vpop.permute.xlu0 %819
          %v821 = vrot.slane %v820, 1
          %vm822 = vcmask 678912
          %v823 = vsel %vm822, %v820, %v821
          %v825 = vadd.f32 %v814, %v823
          %s826 = sld [smem:[#allocation6 + $0x10]]
          %v827 = vstv %s826
          %v828 = vmul.f32 %v827, %v803
          %830 = vrot.lane.b32.xlu0 %v828, 82
          %v831 = vpop.permute.xlu0 %830
          %v832 = vrot.slane %v831, 1
          %vm833 = vcmask 670720
          %v834 = vsel %vm833, %v831, %v832
          %v836 = vadd.f32 %v825, %v834
          %s837 = sld [smem:[#allocation6 + $0x11]]
          %v838 = vstv %s837
          %v839 = vmul.f32 %v838, %v803
          %841 = vrot.lane.b32.xlu0 %v839, 81
          %v842 = vpop.permute.xlu0 %841
          %v843 = vrot.slane %v842, 1
          %v844 = vsel %vm347, %v842, %v843
          %v846 = vadd.f32 %v836, %v844
          %s847 = sld [smem:[#allocation6 + $0x12]]
          %v848 = vstv %s847
          %v849 = vmul.f32 %v848, %v803
          %851 = vrot.lane.b32.xlu0 %v849, 80
          %v852 = vpop.permute.xlu0 %851
          %v853 = vrot.slane %v852, 1
          %vm854 = vcmask 654336
          %v855 = vsel %vm854, %v852, %v853
          %v857 = vadd.f32 %v846, %v855
          %s858 = sld [smem:[#allocation6 + $0x13]]
          %v859 = vstv %s858
          %v860 = vmul.f32 %v859, %v803
          %862 = vrot.lane.b32.xlu0 %v860, 79
          %v863 = vpop.permute.xlu0 %862
          %v864 = vrot.slane %v863, 1
          %vm865 = vcmask 646144
          %v866 = vsel %vm865, %v863, %v864
          %v868 = vadd.f32 %v857, %v866
          %s869 = sld [smem:[#allocation6 + $0x14]]
          %v870 = vstv %s869
          %v871 = vmul.f32 %v870, %v803
          %873 = vrot.lane.b32.xlu0 %v871, 78
          %v874 = vpop.permute.xlu0 %873
          %v875 = vrot.slane %v874, 1
          %vm876 = vcmask 637952
          %v877 = vsel %vm876, %v874, %v875
          %v879 = vadd.f32 %v868, %v877
          %s880 = sld [smem:[#allocation6 + $0x15]]
          %v881 = vstv %s880
          %v882 = vmul.f32 %v881, %v803
          %884 = vrot.lane.b32.xlu0 %v882, 62
          %v885 = vpop.permute.xlu0 %884
          %v886 = vrot.slane %v885, 1
          %vm887 = vcmask 506880
          %v888 = vsel %vm887, %v885, %v886
          %v890 = vadd.f32 %v879, %v888
          %s891 = sld [smem:[#allocation6 + $0x16]]
          %v892 = vstv %s891
          %v893 = vmul.f32 %v892, %v803
          %895 = vrot.lane.b32.xlu0 %v893, 61
          %v896 = vpop.permute.xlu0 %895
          %v897 = vrot.slane %v896, 1
          %vm898 = vcmask 498688
          %v899 = vsel %vm898, %v896, %v897
          %v901 = vadd.f32 %v890, %v899
          %s902 = sld [smem:[#allocation6 + $0x17]]
          %v903 = vstv %s902
          %v904 = vmul.f32 %v903, %v803
          %906 = vrot.lane.b32.xlu0 %v904, 60
          %v907 = vpop.permute.xlu0 %906
          %v908 = vrot.slane %v907, 1
          %vm909 = vcmask 490496
          %v910 = vsel %vm909, %v907, %v908
          %v912 = vadd.f32 %v901, %v910
          %s913 = sld [smem:[#allocation6 + $0x18]]
          %v914 = vstv %s913
          %v915 = vmul.f32 %v914, %v803
          %917 = vrot.lane.b32.xlu0 %v915, 59
          %v918 = vpop.permute.xlu0 %917
          %v919 = vrot.slane %v918, 1
          %vm920 = vcmask 482304
          %v921 = vsel %vm920, %v918, %v919
          %v923 = vadd.f32 %v912, %v921
          %s924 = sld [smem:[#allocation6 + $0x19]]
          %v925 = vstv %s924
          %v926 = vmul.f32 %v925, %v803
          %928 = vrot.lane.b32.xlu0 %v926, 58
          %v929 = vpop.permute.xlu0 %928
          %v930 = vrot.slane %v929, 1
          %vm931 = vcmask 474112
          %v932 = vsel %vm931, %v929, %v930
          %v934 = vadd.f32 %v923, %v932
          %s935 = sld [smem:[#allocation6 + $0x1a]]
          %v936 = vstv %s935
          %v937 = vmul.f32 %v936, %v803
          %939 = vrot.lane.b32.xlu0 %v937, 57
          %v940 = vpop.permute.xlu0 %939
          %v941 = vrot.slane %v940, 1
          %vm942 = vcmask 465920
          %v943 = vsel %vm942, %v940, %v941
          %v945 = vadd.f32 %v934, %v943
          %s946 = sld [smem:[#allocation6 + $0x1b]]
          %v947 = vstv %s946
          %v948 = vmul.f32 %v947, %v803
          %950 = vrot.lane.b32.xlu0 %v948, 56
          %v951 = vpop.permute.xlu0 %950
          %v952 = vrot.slane %v951, 1
          %vm953 = vcmask 457728
          %v954 = vsel %vm953, %v951, %v952
          %v956 = vadd.f32 %v945, %v954
          %s957 = sld [smem:[#allocation6 + $0x1c]]
          %v958 = vstv %s957
          %v959 = vmul.f32 %v958, %v803
          %961 = vrot.lane.b32.xlu0 %v959, 40
          %v962 = vpop.permute.xlu0 %961
          %v963 = vrot.slane %v962, 1
          %vm964 = vcmask 326656
          %v965 = vsel %vm964, %v962, %v963
          %v967 = vadd.f32 %v956, %v965
          %s968 = sld [smem:[#allocation6 + $0x1d]]
          %v969 = vstv %s968
          %v970 = vmul.f32 %v969, %v803
          %972 = vrot.lane.b32.xlu0 %v970, 39
          %v973 = vpop.permute.xlu0 %972
          %v974 = vrot.slane %v973, 1
          %vm975 = vcmask 318464
          %v976 = vsel %vm975, %v973, %v974
          %v978 = vadd.f32 %v967, %v976
          %s979 = sld [smem:[#allocation6 + $0x1e]]
          %v980 = vstv %s979
          %v981 = vmul.f32 %v980, %v803
          %983 = vrot.lane.b32.xlu0 %v981, 38
          %v984 = vpop.permute.xlu0 %983
          %v985 = vrot.slane %v984, 1
          %vm986 = vcmask 310272
          %v987 = vsel %vm986, %v984, %v985
          %v989 = vadd.f32 %v978, %v987
          %s990 = sld [smem:[#allocation6 + $0x1f]]
          %v991 = vstv %s990
          %v992 = vmul.f32 %v991, %v803
          %994 = vrot.lane.b32.xlu0 %v992, 37
          %v995 = vpop.permute.xlu0 %994
          %v996 = vrot.slane %v995, 1
          %vm997 = vcmask 302080
          %v998 = vsel %vm997, %v995, %v996
          %v1000 = vadd.f32 %v989, %v998
          %s1001 = sld [smem:[#allocation6 + $0x20]]
          %v1002 = vstv %s1001
          %v1003 = vmul.f32 %v1002, %v803
          %1005 = vrot.lane.b32.xlu0 %v1003, 36
          %v1006 = vpop.permute.xlu0 %1005
          %v1007 = vrot.slane %v1006, 1
          %vm1008 = vcmask 293888
          %v1009 = vsel %vm1008, %v1006, %v1007
          %v1011 = vadd.f32 %v1000, %v1009
          %s1012 = sld [smem:[#allocation6 + $0x21]]
          %v1013 = vstv %s1012
          %v1014 = vmul.f32 %v1013, %v803
          %1016 = vrot.lane.b32.xlu0 %v1014, 35
          %v1017 = vpop.permute.xlu0 %1016
          %v1018 = vrot.slane %v1017, 1
          %vm1019 = vcmask 285696
          %v1020 = vsel %vm1019, %v1017, %v1018
          %v1022 = vadd.f32 %v1011, %v1020
          %s1023 = sld [smem:[#allocation6 + $0x22]]
          %v1024 = vstv %s1023
          %v1025 = vmul.f32 %v1024, %v803
          %1027 = vrot.lane.b32.xlu0 %v1025, 34
          %v1028 = vpop.permute.xlu0 %1027
          %v1029 = vrot.slane %v1028, 1
          %vm1030 = vcmask 277504
          %v1031 = vsel %vm1030, %v1028, %v1029
          %v1033 = vadd.f32 %v1022, %v1031
          %s1034 = sld [smem:[#allocation6 + $0x23]]
          %v1035 = vstv %s1034
          %v1036 = vmul.f32 %v1035, %v803
          %1038 = vrot.lane.b32.xlu0 %v1036, 18
          %v1039 = vpop.permute.xlu0 %1038
          %v1040 = vrot.slane %v1039, 1
          %vm1041 = vcmask 146432
          %v1042 = vsel %vm1041, %v1039, %v1040
          %v1044 = vadd.f32 %v1033, %v1042
          %s1045 = sld [smem:[#allocation6 + $0x24]]
          %v1046 = vstv %s1045
          %v1047 = vmul.f32 %v1046, %v803
          %1049 = vrot.lane.b32.xlu0 %v1047, 17
          %v1050 = vpop.permute.xlu0 %1049
          %v1051 = vrot.slane %v1050, 1
          %vm1052 = vcmask 138240
          %v1053 = vsel %vm1052, %v1050, %v1051
          %v1055 = vadd.f32 %v1044, %v1053
          %s1056 = sld [smem:[#allocation6 + $0x25]]
          %v1057 = vstv %s1056
          %v1058 = vmul.f32 %v1057, %v803
          %1060 = vrot.lane.b32.xlu0 %v1058, 16
          %v1061 = vpop.permute.xlu0 %1060
          %v1062 = vrot.slane %v1061, 1
          %vm1063 = vcmask 130048
          %v1064 = vsel %vm1063, %v1061, %v1062
          %v1066 = vadd.f32 %v1055, %v1064
          %s1067 = sld [smem:[#allocation6 + $0x26]]
          %v1068 = vstv %s1067
          %v1069 = vmul.f32 %v1068, %v803
          %1071 = vrot.lane.b32.xlu0 %v1069, 15
          %v1072 = vpop.permute.xlu0 %1071
          %v1073 = vrot.slane %v1072, 1
          %vm1074 = vcmask 121856
          %v1075 = vsel %vm1074, %v1072, %v1073
          %v1077 = vadd.f32 %v1066, %v1075
          %s1078 = sld [smem:[#allocation6 + $0x27]]
          %v1079 = vstv %s1078
          %v1080 = vmul.f32 %v1079, %v803
          %1082 = vrot.lane.b32.xlu0 %v1080, 14
          %v1083 = vpop.permute.xlu0 %1082
          %v1084 = vrot.slane %v1083, 1
          %vm1085 = vcmask 113664
          %v1086 = vsel %vm1085, %v1083, %v1084
          %v1088 = vadd.f32 %v1077, %v1086
          %s1089 = sld [smem:[#allocation6 + $0x28]]
          %v1090 = vstv %s1089
          %v1091 = vmul.f32 %v1090, %v803
          %1093 = vrot.lane.b32.xlu0 %v1091, 13
          %v1094 = vpop.permute.xlu0 %1093
          %v1095 = vrot.slane %v1094, 1
          %vm1096 = vcmask 105472
          %v1097 = vsel %vm1096, %v1094, %v1095
          %v1099 = vadd.f32 %v1088, %v1097
          %s1100 = sld [smem:[#allocation6 + $0x29]]
          %v1101 = vstv %s1100
          %v1102 = vmul.f32 %v1101, %v803
          %1104 = vrot.lane.b32.xlu0 %v1102, 12
          %v1105 = vpop.permute.xlu0 %1104
          %v1106 = vrot.slane %v1105, 1
          %vm1107 = vcmask 97280
          %v1108 = vsel %vm1107, %v1105, %v1106
          %v1110 = vadd.f32 %v1099, %v1108
          %s1111 = scalar_lea.vmem [#allocation4], 2
          %v1112 = vld [vmem:[%s1111] ss:$2 sm:$0x7]
          %s1113 = sld [smem:[#allocation6 + $0x2a]]
          %v1114 = vstv %s1113
          %v1115 = vmul.f32 %v1114, %v1112
          %1117 = vrot.lane.b32.xlu0 %v1115, 124
          %v1118 = vpop.permute.xlu0 %1117
          %v1119 = vrot.slane %v1118, 1
          %v1120 = vsel %vm700, %v1118, %v1119
          %v1122 = vadd.f32 %v1110, %v1120
          %s1123 = sld [smem:[#allocation6 + $0x2b]]
          %v1124 = vstv %s1123
          %v1125 = vmul.f32 %v1124, %v1112
          %1127 = vrot.lane.b32.xlu0 %v1125, 123
          %v1128 = vpop.permute.xlu0 %1127
          %v1129 = vrot.slane %v1128, 1
          %v1130 = vsel %vm711, %v1128, %v1129
          %v1132 = vadd.f32 %v1122, %v1130
          %s1133 = sld [smem:[#allocation6 + $0x2c]]
          %v1134 = vstv %s1133
          %v1135 = vmul.f32 %v1134, %v1112
          %1137 = vrot.lane.b32.xlu0 %v1135, 122
          %v1138 = vpop.permute.xlu0 %1137
          %v1139 = vrot.slane %v1138, 1
          %v1140 = vsel %vm722, %v1138, %v1139
          %v1142 = vadd.f32 %v1132, %v1140
          %s1143 = sld [smem:[#allocation6 + $0x2d]]
          %v1144 = vstv %s1143
          %v1145 = vmul.f32 %v1144, %v1112
          %1147 = vrot.lane.b32.xlu0 %v1145, 121
          %v1148 = vpop.permute.xlu0 %1147
          %v1149 = vrot.slane %v1148, 1
          %vm1150 = vcmask 990208
          %v1151 = vsel %vm1150, %v1148, %v1149
          %v1153 = vadd.f32 %v1142, %v1151
          %s1154 = sld [smem:[#allocation6 + $0x2e]]
          %v1155 = vstv %s1154
          %v1156 = vmul.f32 %v1155, %v1112
          %1158 = vrot.lane.b32.xlu0 %v1156, 120
          %v1159 = vpop.permute.xlu0 %1158
          %v1160 = vrot.slane %v1159, 1
          %vm1161 = vcmask 982016
          %v1162 = vsel %vm1161, %v1159, %v1160
          %v1164 = vadd.f32 %v1153, %v1162
          %s1165 = sld [smem:[#allocation6 + $0x2f]]
          %v1166 = vstv %s1165
          %v1167 = vmul.f32 %v1166, %v1112
          %1169 = vrot.lane.b32.xlu0 %v1167, 119
          %v1170 = vpop.permute.xlu0 %1169
          %v1171 = vrot.slane %v1170, 1
          %vm1172 = vcmask 973824
          %v1173 = vsel %vm1172, %v1170, %v1171
          %v1175 = vadd.f32 %v1164, %v1173
          %s1176 = sld [smem:[#allocation6 + $0x30]]
          %v1177 = vstv %s1176
          %v1178 = vmul.f32 %v1177, %v1112
          %1180 = vrot.lane.b32.xlu0 %v1178, 118
          %v1181 = vpop.permute.xlu0 %1180
          %v1182 = vrot.slane %v1181, 1
          %vm1183 = vcmask 965632
          %v1184 = vsel %vm1183, %v1181, %v1182
          %v1186 = vadd.f32 %v1175, %v1184
          %s1187 = scalar_lea.vmem [#allocation4], 1
          %v1188 = vld [vmem:[%s1187] ss:$2 sm:$0x7]
          %s1189 = sld [smem:[#allocation6 + $0x31]]
          %v1190 = vstv %s1189
          %v1191 = vmul.f32 %v1190, %v1188
          %v1192 = vadd.f32 %v1186, %v1191
          %s1193 = sld [smem:[#allocation6 + $0x32]]
          %v1194 = vstv %s1193
          %v1195 = vmul.f32 %v1194, %v1188
          %1197 = vrot.lane.b32.xlu0 %v1195, 127
          %v1198 = vpop.permute.xlu0 %1197
          %v1199 = vrot.slane %v1198, 1
          %v1200 = vsel %vm667, %v1198, %v1199
          %v1202 = vadd.f32 %v1192, %v1200
          %s1203 = sld [smem:[#allocation6 + $0x33]]
          %v1204 = vstv %s1203
          %v1205 = vmul.f32 %v1204, %v1188
          %1207 = vrot.lane.b32.xlu0 %v1205, 126
          %v1208 = vpop.permute.xlu0 %1207
          %v1209 = vrot.slane %v1208, 1
          %v1210 = vsel %vm678, %v1208, %v1209
          %v1212 = vadd.f32 %v1202, %v1210
          %s1213 = sld [smem:[#allocation6 + $0x34]]
          %v1214 = vstv %s1213
          %v1215 = vmul.f32 %v1214, %v1188
          %1217 = vrot.lane.b32.xlu0 %v1215, 125
          %v1218 = vpop.permute.xlu0 %1217
          %v1219 = vrot.slane %v1218, 1
          %v1220 = vsel %vm689, %v1218, %v1219
          %v1222 = vadd.f32 %v1212, %v1220
          %s1223 = sld [smem:[#allocation6 + $0x35]]
          %v1224 = vstv %s1223
          %v1225 = vmul.f32 %v1224, %v1188
          %1227 = vrot.lane.b32.xlu0 %v1225, 124
          %v1228 = vpop.permute.xlu0 %1227
          %v1229 = vrot.slane %v1228, 1
          %v1230 = vsel %vm700, %v1228, %v1229
          %v1232 = vadd.f32 %v1222, %v1230
          %s1233 = sld [smem:[#allocation6 + $0x36]]
          %v1234 = vstv %s1233
          %v1235 = vmul.f32 %v1234, %v1188
          %1237 = vrot.lane.b32.xlu0 %v1235, 123
          %v1238 = vpop.permute.xlu0 %1237
          %v1239 = vrot.slane %v1238, 1
          %v1240 = vsel %vm711, %v1238, %v1239
          %v1242 = vadd.f32 %v1232, %v1240
          %s1243 = sld [smem:[#allocation6 + $0x37]]
          %v1244 = vstv %s1243
          %v1245 = vmul.f32 %v1244, %v1188
          %1247 = vrot.lane.b32.xlu0 %v1245, 122
          %v1248 = vpop.permute.xlu0 %1247
          %v1249 = vrot.slane %v1248, 1
          %v1250 = vsel %vm722, %v1248, %v1249
          %v1252 = vadd.f32 %v1242, %v1250
          %s1253 = sld [smem:[#allocation6 + $0x38]]
          %v1254 = vstv %s1253
          %v1255 = vmul.f32 %v1254, %v1188
          %1257 = vrot.lane.b32.xlu0 %v1255, 106
          %v1258 = vpop.permute.xlu0 %1257
          %v1259 = vrot.slane %v1258, 1
          %v1260 = vsel %vm733, %v1258, %v1259
          %v1262 = vadd.f32 %v1252, %v1260
          %s1263 = sld [smem:[#allocation6 + $0x39]]
          %v1264 = vstv %s1263
          %v1265 = vmul.f32 %v1264, %v1188
          %1267 = vrot.lane.b32.xlu0 %v1265, 105
          %v1268 = vpop.permute.xlu0 %1267
          %v1269 = vrot.slane %v1268, 1
          %v1270 = vsel %vm744, %v1268, %v1269
          %v1272 = vadd.f32 %v1262, %v1270
          %s1273 = sld [smem:[#allocation6 + $0x3a]]
          %v1274 = vstv %s1273
          %v1275 = vmul.f32 %v1274, %v1188
          %1277 = vrot.lane.b32.xlu0 %v1275, 104
          %v1278 = vpop.permute.xlu0 %1277
          %v1279 = vrot.slane %v1278, 1
          %v1280 = vsel %vm755, %v1278, %v1279
          %v1282 = vadd.f32 %v1272, %v1280
          %s1283 = sld [smem:[#allocation6 + $0x3b]]
          %v1284 = vstv %s1283
          %v1285 = vmul.f32 %v1284, %v1188
          %1287 = vrot.lane.b32.xlu0 %v1285, 103
          %v1288 = vpop.permute.xlu0 %1287
          %v1289 = vrot.slane %v1288, 1
          %v1290 = vsel %vm766, %v1288, %v1289
          %v1292 = vadd.f32 %v1282, %v1290
          %s1293 = sld [smem:[#allocation6 + $0x3c]]
          %v1294 = vstv %s1293
          %v1295 = vmul.f32 %v1294, %v1188
          %1297 = vrot.lane.b32.xlu0 %v1295, 102
          %v1298 = vpop.permute.xlu0 %1297
          %v1299 = vrot.slane %v1298, 1
          %v1300 = vsel %vm777, %v1298, %v1299
          %v1302 = vadd.f32 %v1292, %v1300
          %s1303 = sld [smem:[#allocation6 + $0x3d]]
          %v1304 = vstv %s1303
          %v1305 = vmul.f32 %v1304, %v1188
          %1307 = vrot.lane.b32.xlu0 %v1305, 101
          %v1308 = vpop.permute.xlu0 %1307
          %v1309 = vrot.slane %v1308, 1
          %v1310 = vsel %vm788, %v1308, %v1309
          %v1312 = vadd.f32 %v1302, %v1310
          %s1313 = sld [smem:[#allocation6 + $0x3e]]
          %v1314 = vstv %s1313
          %v1315 = vmul.f32 %v1314, %v1188
          %1317 = vrot.lane.b32.xlu0 %v1315, 100
          %v1318 = vpop.permute.xlu0 %1317
          %v1319 = vrot.slane %v1318, 1
          %v1320 = vsel %vm799, %v1318, %v1319
          %v1322 = vadd.f32 %v1312, %v1320
          %s1323 = scalar_lea.vmem [#allocation4], 1
          %v1324 = vld [vmem:[%s1323] ss:$2 sm:$0xf]
          %s1325 = sld [smem:[#allocation6 + $0x3f]]
          %v1326 = vstv %s1325
          %v1327 = vmul.f32 %v1326, %v1324
          %1329 = vrot.lane.b32.xlu0 %v1327, 84
          %v1330 = vpop.permute.xlu0 %1329
          %v1331 = vrot.slane %v1330, 1
          %v1332 = vsel %vm811, %v1330, %v1331
          %v1334 = vadd.f32 %v1322, %v1332
          %s1335 = sld [smem:[#allocation6 + $0x40]]
          %v1336 = vstv %s1335
          %v1337 = vmul.f32 %v1336, %v1324
          %1339 = vrot.lane.b32.xlu0 %v1337, 83
          %v1340 = vpop.permute.xlu0 %1339
          %v1341 = vrot.slane %v1340, 1
          %v1342 = vsel %vm822, %v1340, %v1341
          %v1344 = vadd.f32 %v1334, %v1342
          %s1345 = sld [smem:[#allocation6 + $0x41]]
          %v1346 = vstv %s1345
          %v1347 = vmul.f32 %v1346, %v1324
          %1349 = vrot.lane.b32.xlu0 %v1347, 82
          %v1350 = vpop.permute.xlu0 %1349
          %v1351 = vrot.slane %v1350, 1
          %v1352 = vsel %vm833, %v1350, %v1351
          %v1354 = vadd.f32 %v1344, %v1352
          %s1355 = sld [smem:[#allocation6 + $0x42]]
          %v1356 = vstv %s1355
          %v1357 = vmul.f32 %v1356, %v1324
          %1359 = vrot.lane.b32.xlu0 %v1357, 81
          %v1360 = vpop.permute.xlu0 %1359
          %v1361 = vrot.slane %v1360, 1
          %v1362 = vsel %vm347, %v1360, %v1361
          %v1364 = vadd.f32 %v1354, %v1362
          %s1365 = sld [smem:[#allocation6 + $0x43]]
          %v1366 = vstv %s1365
          %v1367 = vmul.f32 %v1366, %v1324
          %1369 = vrot.lane.b32.xlu0 %v1367, 80
          %v1370 = vpop.permute.xlu0 %1369
          %v1371 = vrot.slane %v1370, 1
          %v1372 = vsel %vm854, %v1370, %v1371
          %v1374 = vadd.f32 %v1364, %v1372
          %s1375 = sld [smem:[#allocation6 + $0x44]]
          %v1376 = vstv %s1375
          %v1377 = vmul.f32 %v1376, %v1324
          %1379 = vrot.lane.b32.xlu0 %v1377, 79
          %v1380 = vpop.permute.xlu0 %1379
          %v1381 = vrot.slane %v1380, 1
          %v1382 = vsel %vm865, %v1380, %v1381
          %v1384 = vadd.f32 %v1374, %v1382
          %s1385 = sld [smem:[#allocation6 + $0x45]]
          %v1386 = vstv %s1385
          %v1387 = vmul.f32 %v1386, %v1324
          %1389 = vrot.lane.b32.xlu0 %v1387, 78
          %v1390 = vpop.permute.xlu0 %1389
          %v1391 = vrot.slane %v1390, 1
          %v1392 = vsel %vm876, %v1390, %v1391
          %v1394 = vadd.f32 %v1384, %v1392
          %s1395 = sld [smem:[#allocation6 + $0x46]]
          %v1396 = vstv %s1395
          %v1397 = vmul.f32 %v1396, %v1324
          %1399 = vrot.lane.b32.xlu0 %v1397, 62
          %v1400 = vpop.permute.xlu0 %1399
          %v1401 = vrot.slane %v1400, 1
          %v1402 = vsel %vm887, %v1400, %v1401
          %v1404 = vadd.f32 %v1394, %v1402
          %s1405 = sld [smem:[#allocation6 + $0x47]]
          %v1406 = vstv %s1405
          %v1407 = vmul.f32 %v1406, %v1324
          %1409 = vrot.lane.b32.xlu0 %v1407, 61
          %v1410 = vpop.permute.xlu0 %1409
          %v1411 = vrot.slane %v1410, 1
          %v1412 = vsel %vm898, %v1410, %v1411
          %v1414 = vadd.f32 %v1404, %v1412
          %s1415 = sld [smem:[#allocation6 + $0x48]]
          %v1416 = vstv %s1415
          %v1417 = vmul.f32 %v1416, %v1324
          %1419 = vrot.lane.b32.xlu0 %v1417, 60
          %v1420 = vpop.permute.xlu0 %1419
          %v1421 = vrot.slane %v1420, 1
          %v1422 = vsel %vm909, %v1420, %v1421
          %v1424 = vadd.f32 %v1414, %v1422
          %s1425 = sld [smem:[#allocation6 + $0x49]]
          %v1426 = vstv %s1425
          %v1427 = vmul.f32 %v1426, %v1324
          %1429 = vrot.lane.b32.xlu0 %v1427, 59
          %v1430 = vpop.permute.xlu0 %1429
          %v1431 = vrot.slane %v1430, 1
          %v1432 = vsel %vm920, %v1430, %v1431
          %v1434 = vadd.f32 %v1424, %v1432
          %s1435 = sld [smem:[#allocation6 + $0x4a]]
          %v1436 = vstv %s1435
          %v1437 = vmul.f32 %v1436, %v1324
          %1439 = vrot.lane.b32.xlu0 %v1437, 58
          %v1440 = vpop.permute.xlu0 %1439
          %v1441 = vrot.slane %v1440, 1
          %v1442 = vsel %vm931, %v1440, %v1441
          %v1444 = vadd.f32 %v1434, %v1442
          %s1445 = sld [smem:[#allocation6 + $0x4b]]
          %v1446 = vstv %s1445
          %v1447 = vmul.f32 %v1446, %v1324
          %1449 = vrot.lane.b32.xlu0 %v1447, 57
          %v1450 = vpop.permute.xlu0 %1449
          %v1451 = vrot.slane %v1450, 1
          %v1452 = vsel %vm942, %v1450, %v1451
          %v1454 = vadd.f32 %v1444, %v1452
          %s1455 = sld [smem:[#allocation6 + $0x4c]]
          %v1456 = vstv %s1455
          %v1457 = vmul.f32 %v1456, %v1324
          %1459 = vrot.lane.b32.xlu0 %v1457, 56
          %v1460 = vpop.permute.xlu0 %1459
          %v1461 = vrot.slane %v1460, 1
          %v1462 = vsel %vm953, %v1460, %v1461
          %v1464 = vadd.f32 %v1454, %v1462
          %s1465 = sld [smem:[#allocation6 + $0x4d]]
          %v1466 = vstv %s1465
          %v1467 = vmul.f32 %v1466, %v1324
          %1469 = vrot.lane.b32.xlu0 %v1467, 40
          %v1470 = vpop.permute.xlu0 %1469
          %v1471 = vrot.slane %v1470, 1
          %v1472 = vsel %vm964, %v1470, %v1471
          %v1474 = vadd.f32 %v1464, %v1472
          %s1475 = sld [smem:[#allocation6 + $0x4e]]
          %v1476 = vstv %s1475
          %v1477 = vmul.f32 %v1476, %v1324
          %1479 = vrot.lane.b32.xlu0 %v1477, 39
          %v1480 = vpop.permute.xlu0 %1479
          %v1481 = vrot.slane %v1480, 1
          %v1482 = vsel %vm975, %v1480, %v1481
          %v1484 = vadd.f32 %v1474, %v1482
          %s1485 = sld [smem:[#allocation6 + $0x4f]]
          %v1486 = vstv %s1485
          %v1487 = vmul.f32 %v1486, %v1324
          %1489 = vrot.lane.b32.xlu0 %v1487, 38
          %v1490 = vpop.permute.xlu0 %1489
          %v1491 = vrot.slane %v1490, 1
          %v1492 = vsel %vm986, %v1490, %v1491
          %v1494 = vadd.f32 %v1484, %v1492
          %s1495 = sld [smem:[#allocation6 + $0x50]]
          %v1496 = vstv %s1495
          %v1497 = vmul.f32 %v1496, %v1324
          %1499 = vrot.lane.b32.xlu0 %v1497, 37
          %v1500 = vpop.permute.xlu0 %1499
          %v1501 = vrot.slane %v1500, 1
          %v1502 = vsel %vm997, %v1500, %v1501
          %v1504 = vadd.f32 %v1494, %v1502
          %s1505 = sld [smem:[#allocation6 + $0x51]]
          %v1506 = vstv %s1505
          %v1507 = vmul.f32 %v1506, %v1324
          %1509 = vrot.lane.b32.xlu0 %v1507, 36
          %v1510 = vpop.permute.xlu0 %1509
          %v1511 = vrot.slane %v1510, 1
          %v1512 = vsel %vm1008, %v1510, %v1511
          %v1514 = vadd.f32 %v1504, %v1512
          %s1515 = sld [smem:[#allocation6 + $0x52]]
          %v1516 = vstv %s1515
          %v1517 = vmul.f32 %v1516, %v1324
          %1519 = vrot.lane.b32.xlu0 %v1517, 35
          %v1520 = vpop.permute.xlu0 %1519
          %v1521 = vrot.slane %v1520, 1
          %v1522 = vsel %vm1019, %v1520, %v1521
          %v1524 = vadd.f32 %v1514, %v1522
          %s1525 = sld [smem:[#allocation6 + $0x53]]
          %v1526 = vstv %s1525
          %v1527 = vmul.f32 %v1526, %v1324
          %1529 = vrot.lane.b32.xlu0 %v1527, 34
          %v1530 = vpop.permute.xlu0 %1529
          %v1531 = vrot.slane %v1530, 1
          %v1532 = vsel %vm1030, %v1530, %v1531
          %v1534 = vadd.f32 %v1524, %v1532
          %s1535 = sld [smem:[#allocation6 + $0x54]]
          %v1536 = vstv %s1535
          %v1537 = vmul.f32 %v1536, %v1324
          %1539 = vrot.lane.b32.xlu0 %v1537, 18
          %v1540 = vpop.permute.xlu0 %1539
          %v1541 = vrot.slane %v1540, 1
          %v1542 = vsel %vm1041, %v1540, %v1541
          %v1544 = vadd.f32 %v1534, %v1542
          %s1545 = sld [smem:[#allocation6 + $0x55]]
          %v1546 = vstv %s1545
          %v1547 = vmul.f32 %v1546, %v1324
          %1549 = vrot.lane.b32.xlu0 %v1547, 17
          %v1550 = vpop.permute.xlu0 %1549
          %v1551 = vrot.slane %v1550, 1
          %v1552 = vsel %vm1052, %v1550, %v1551
          %v1554 = vadd.f32 %v1544, %v1552
          %s1555 = sld [smem:[#allocation6 + $0x56]]
          %v1556 = vstv %s1555
          %v1557 = vmul.f32 %v1556, %v1324
          %1559 = vrot.lane.b32.xlu0 %v1557, 16
          %v1560 = vpop.permute.xlu0 %1559
          %v1561 = vrot.slane %v1560, 1
          %v1562 = vsel %vm1063, %v1560, %v1561
          %v1564 = vadd.f32 %v1554, %v1562
          %s1565 = sld [smem:[#allocation6 + $0x57]]
          %v1566 = vstv %s1565
          %v1567 = vmul.f32 %v1566, %v1324
          %1569 = vrot.lane.b32.xlu0 %v1567, 15
          %v1570 = vpop.permute.xlu0 %1569
          %v1571 = vrot.slane %v1570, 1
          %v1572 = vsel %vm1074, %v1570, %v1571
          %v1574 = vadd.f32 %v1564, %v1572
          %s1575 = sld [smem:[#allocation6 + $0x58]]
          %v1576 = vstv %s1575
          %v1577 = vmul.f32 %v1576, %v1324
          %1579 = vrot.lane.b32.xlu0 %v1577, 14
          %v1580 = vpop.permute.xlu0 %1579
          %v1581 = vrot.slane %v1580, 1
          %v1582 = vsel %vm1085, %v1580, %v1581
          %v1584 = vadd.f32 %v1574, %v1582
          %s1585 = sld [smem:[#allocation6 + $0x59]]
          %v1586 = vstv %s1585
          %v1587 = vmul.f32 %v1586, %v1324
          %1589 = vrot.lane.b32.xlu0 %v1587, 13
          %v1590 = vpop.permute.xlu0 %1589
          %v1591 = vrot.slane %v1590, 1
          %v1592 = vsel %vm1096, %v1590, %v1591
          %v1594 = vadd.f32 %v1584, %v1592
          %s1595 = sld [smem:[#allocation6 + $0x5a]]
          %v1596 = vstv %s1595
          %v1597 = vmul.f32 %v1596, %v1324
          %1599 = vrot.lane.b32.xlu0 %v1597, 12
          %v1600 = vpop.permute.xlu0 %1599
          %v1601 = vrot.slane %v1600, 1
          %v1602 = vsel %vm1107, %v1600, %v1601
          %v1604 = vadd.f32 %v1594, %v1602
          %s1605 = scalar_lea.vmem [#allocation4], 3
          %v1606 = vld [vmem:[%s1605] ss:$2 sm:$0x7]
          %s1607 = sld [smem:[#allocation6 + $0x5b]]
          %v1608 = vstv %s1607
          %v1609 = vmul.f32 %v1608, %v1606
          %1611 = vrot.lane.b32.xlu0 %v1609, 124
          %v1612 = vpop.permute.xlu0 %1611
          %v1613 = vrot.slane %v1612, 1
          %v1614 = vsel %vm700, %v1612, %v1613
          %v1616 = vadd.f32 %v1604, %v1614
          %s1617 = sld [smem:[#allocation6 + $0x5c]]
          %v1618 = vstv %s1617
          %v1619 = vmul.f32 %v1618, %v1606
          %1621 = vrot.lane.b32.xlu0 %v1619, 123
          %v1622 = vpop.permute.xlu0 %1621
          %v1623 = vrot.slane %v1622, 1
          %v1624 = vsel %vm711, %v1622, %v1623
          %v1626 = vadd.f32 %v1616, %v1624
          %s1627 = sld [smem:[#allocation6 + $0x5d]]
          %v1628 = vstv %s1627
          %v1629 = vmul.f32 %v1628, %v1606
          %1631 = vrot.lane.b32.xlu0 %v1629, 122
          %v1632 = vpop.permute.xlu0 %1631
          %v1633 = vrot.slane %v1632, 1
          %v1634 = vsel %vm722, %v1632, %v1633
          %v1636 = vadd.f32 %v1626, %v1634
          %s1637 = sld [smem:[#allocation6 + $0x5e]]
          %v1638 = vstv %s1637
          %v1639 = vmul.f32 %v1638, %v1606
          %1641 = vrot.lane.b32.xlu0 %v1639, 121
          %v1642 = vpop.permute.xlu0 %1641
          %v1643 = vrot.slane %v1642, 1
          %v1644 = vsel %vm1150, %v1642, %v1643
          %v1646 = vadd.f32 %v1636, %v1644
          %s1647 = sld [smem:[#allocation6 + $0x5f]]
          %v1648 = vstv %s1647
          %v1649 = vmul.f32 %v1648, %v1606
          %1651 = vrot.lane.b32.xlu0 %v1649, 120
          %v1652 = vpop.permute.xlu0 %1651
          %v1653 = vrot.slane %v1652, 1
          %v1654 = vsel %vm1161, %v1652, %v1653
          %v1656 = vadd.f32 %v1646, %v1654
          %s1657 = sld [smem:[#allocation6 + $0x60]]
          %v1658 = vstv %s1657
          %v1659 = vmul.f32 %v1658, %v1606
          %1661 = vrot.lane.b32.xlu0 %v1659, 119
          %v1662 = vpop.permute.xlu0 %1661
          %v1663 = vrot.slane %v1662, 1
          %v1664 = vsel %vm1172, %v1662, %v1663
          %v1666 = vadd.f32 %v1656, %v1664
          %s1667 = sld [smem:[#allocation6 + $0x61]]
          %v1668 = vstv %s1667
          %v1669 = vmul.f32 %v1668, %v1606
          %1671 = vrot.lane.b32.xlu0 %v1669, 118
          %v1672 = vpop.permute.xlu0 %1671
          %v1673 = vrot.slane %v1672, 1
          %v1674 = vsel %vm1183, %v1672, %v1673
          %v1676 = vadd.f32 %v1666, %v1674
          %v1677 = vxor.u32 %v1676, 2147483648
          %v1678 = vmul.f32 %v1677, 1.442695
          %v1679 = vpow.pop %v1678
          %v1680 = vadd.f32 %v1679, 1.0
          %v1681 = vrcp.pop %v1680
          %v1682 = vmul.f32 %v1680, %v1681
          %v1683 = vsub.f32 1.0, %v1682
          %v1684 = vmul.f32 %v1681, %v1683
          %v1685 = vadd.f32 %v1681, %v1684
          %vm1686 = vweird.f32 %v1680
          %vm1687 = vweird.f32 %v1681
          %vm1688 = vmor %vm1686, %vm1687
          %v1689 = vsel %vm1688, %v1681, %v1685
          %v1690 = vand.u32 2147483647, %v1680
          %vm1691 = vcmp.eq.f32.partialorder %v1690, 8.507059e+37
          %v1692 = vand.u32 %v1680, 2147483648
          %v1693 = vor.u32 1.1754944e-38, %v1692
          %v1694 = vsel %vm1691, %v1693, %v1689
          %v1695 = vmul.f32 1.0, %v1694
          %vm1696 = vcmp.lt.s32.totalorder %v260, 352
          %vm1697 = vmand %vm261, %vm1696
          %1698 = vst.msk [vmem:[%s219] sm:$0x7] %vm1697, %v1695
        $region48: #{tpu_custom_call.1} parent=31 // pred_fallthru
          _
        %s1699 = sand.u32 %s112, 1
        %s1700 = scalar_lea.sflag [#allocation8], %s1699
        %s1701 = sand.u32 %s112, 1
        %s1702 = smul.addr %s1701, 3
        %s1703 = scalar_lea.vmem [#allocation11], %s1702
        // Predicated region
        $region49: #{tpu_custom_call.1} parent=31 // pred_check
          %p1704 = pneg %p122
        $region50: #{tpu_custom_call.1} parent=31 // pred_check_branch
          %1706 = sbr.rel (%p1704) target = $region52
        $region51: #{tpu_custom_call.1} parent=31 // pred_region
          %1708 = vsyncadd %s1700, 0
          %s1709 = smul.addr %s26, 3
          %s1710 = scalar_lea.hbm %s3, %s1709
          %s1712 = sshll.u32 %s1703, 4
          %s1713 = int_to_ptr.vmem [resolvable:$true] %s1712
          %s1714 = sshll.u32 %s1710, 4
          %s1715 = int_to_ptr.hbm [resolvable:$true] %s1714
          %1717 = dma.vmem_to_hbm [thread:$0]  %s1713, 48, %s1715, %s1700
        $region52: #{tpu_custom_call.1} parent=31 // pred_fallthru
          _
      $region32: #{tpu_custom_call.1} parent=5 // pred_fallthru
        _
      %p1718 = scmp.le.s32.totalorder 2, %s17
      // Predicated region
      $region53: #{tpu_custom_call.1} parent=5 // pred_check
        %p1719 = pneg %p1718
      $region54: #{tpu_custom_call.1} parent=5 // pred_check_branch
        %1721 = sbr.rel (%p1719) target = $region56
      $region55: #{tpu_custom_call.1} parent=5 // pred_region
        %s1722 = ssub.s32 %s17, 2
        // Predicated region
        $region57: #{tpu_custom_call.1} parent=55 // pred_check
          %p1723 = pneg %p128
        $region58: #{tpu_custom_call.1} parent=55 // pred_check_branch
          %1725 = sbr.rel (%p1723) target = $region60
        $region59: #{tpu_custom_call.1} parent=55 // pred_region
          %s1726 = sand.u32 %s113, 1
          %s1727 = scalar_lea.sflag [#allocation8], %s1726
          %s1728 = sand.u32 %s113, 1
          %s1729 = smul.addr %s1728, 3
          %s1730 = scalar_lea.vmem [#allocation11], %s1729
          %1732 = dma.done %s1727, 48
        $region60: #{tpu_custom_call.1} parent=55 // pred_fallthru
          _
      $region56: #{tpu_custom_call.1} parent=5 // pred_fallthru
        _
    $region6: #{tpu_custom_call.1} parent=1 // loop_footer
      %s21 = sadd.s32 1, %s17
    $region7: #{tpu_custom_call.1} parent=1 // loop_footer_branch
      %16 = sbr.rel target = $region3
    $region8: #{tpu_custom_call.1} parent=1 // loop_exit
      _
    %1733 = vsyncpa [#allocation7], 1
    %s1734 = scalar_lea.sflag [#allocation7], 1
    %1735 = vsyncpa %s1734, 1
    %1736 = vsyncpa [#allocation8], 1
    %s1737 = scalar_lea.sflag [#allocation8], 1
    %1738 = vsyncpa %s1737, 1
    %1739 = vsyncpa [#allocation9], 1
    %s1740 = scalar_lea.sflag [#allocation9], 1
    %1741 = vsyncpa %s1740, 1

</llo_original>
